<compile_context>
chip_gen: v7x
topology: tpu7x:2x2x1
jax: 0.10.0
libtpu: 0.0.40
codegen_flags: <defaults>
</compile_context>

<pallas_src>
import math

import jax
import jax.numpy as jnp
from jax.experimental import pallas as pl
from jax.experimental.pallas import tpu as pltpu


def _ceil_to(x: int, m: int) -> int:
    return ((x + m - 1) // m) * m


def fused_rgcn_kernel(x_ref, adj_ref, binit_ref, wbn_ref, ww_ref, bias_ref,
                      out_ref, y_sc):
    """All R-GCN layers for one graph.

    x_ref:     (1, Np, Dp)        padded node features (f32)
    adj_ref:   (1, Np, R*Np)      relation-major flattened adjacency (bf16, {0,1})
    binit_ref: (1, L, Np, nb_p)   per-layer relation-feature contribution (f32)
    wbn_ref:   (L, R, Dp, nb_p)   per-layer/per-relation bottleneck node chunks
    ww_ref:    (L, nb_p, Dp)      per-layer output weights (transposed, padded)
    bias_ref:  (L,)               per-layer scalar bias (SMEM)
    out_ref:   (1, Np, Dp)        final layer output (padded)
    y_sc:      (R, Np, nb_p)      VMEM scratch for the stacked projections
    """
    num_layers = wbn_ref.shape[0]
    num_relations = wbn_ref.shape[1]
    n_pad = x_ref.shape[1]
    nb_p = wbn_ref.shape[3]

    # Upcast the {0,1} adjacency once per graph; exact, reused by every layer.
    adj = adj_ref[0].astype(jnp.float32)          # (Np, R*Np)
    x = x_ref[0]                                  # (Np, Dp)

    for layer in range(num_layers):
        # Per-relation bottleneck projection of node features -> stacked buffer.
        # (R small matmuls; the dominant aggregation below is a single MXU call.)
        for r in range(num_relations):
            y_sc[r] = jnp.dot(x, wbn_ref[layer, r],
                              preferred_element_type=jnp.float32)
        y = y_sc[...].reshape(num_relations * n_pad, nb_p)       # free leading-dim merge

        # One big MXU call (K = R*N): aggregate over all relations & neighbours,
        # on top of the precomputed relation-feature contribution.
        bases = binit_ref[0, layer] + jnp.dot(adj, y,
                                              preferred_element_type=jnp.float32)

        # Output projection + bias + sigmoid.  Result is the next layer's input
        # (padded columns carry harmless garbage that meets zero weight rows).
        pre = jnp.dot(bases, ww_ref[layer],
                      preferred_element_type=jnp.float32) + bias_ref[layer]
        x = jax.nn.sigmoid(pre)                   # (Np, Dp)

    out_ref[0] = x.astype(out_ref.dtype)


def graph_encoder(node_features, relation_features, adj, layer_params):
    """Stacked R-GCN layers (GraphEncoder.forward) as one fused pallas_call.

    node_features:      (B, N, node_input_dim)
    relation_features:  (B, R, relation_input_dim)
    adj:                (B, R, N, N)
    layer_params:       list of (wb, ww, bias) with torch layouts
                        wb: (nb, R*(d_in+Dr)), ww: (out_dim, nb), bias: scalar
    returns (B, N, out_dim_last)
    """
    B, N, d0 = node_features.shape
    R = adj.shape[1]
    Dr = relation_features.shape[2]
    L = len(layer_params)
    nb = layer_params[0][0].shape[0]

    out_dims = [ww.shape[0] for (_, ww, _) in layer_params]
    d_ins = [d0] + out_dims[:-1]

    # Lane-dense padded dims (128-lane stores / operands) and sublane-aligned N.
    Dp = _ceil_to(max([d0] + out_dims), 128)
    nb_p = _ceil_to(nb, 128)
    Np = _ceil_to(N, 8)

    adj_f32 = adj.astype(jnp.float32)
    # Row-sums are layer-independent; compute once from the f32 adjacency.
    rowsums_t = jnp.transpose(jnp.sum(adj_f32, axis=-1), (0, 2, 1))     # (B, N, R)

    wbn_list, ww_list, bias_list, binit_list = [], [], [], []
    for (wb, ww, bias), d_in in zip(layer_params, d_ins):
        nb_l = wb.shape[0]
        out_dim = ww.shape[0]
        wb_split = wb.reshape(nb_l, R, d_in + Dr)
        wbn = jnp.transpose(wb_split[:, :, :d_in], (1, 2, 0))           # (R, d_in, nb)
        wbr = wb_split[:, :, d_in:]                                     # (nb, R, Dr)

        # Relation-feature rank-1 terms, folded through the bottleneck and the
        # adjacency row-sums entirely in the wrapper (tiny einsums in XLA).
        v = jnp.einsum("brd,krd->brk",
                       relation_features.astype(jnp.float32), wbr)     # (B, R, nb)
        binit = jnp.einsum("bnr,brk->bnk", rowsums_t, v)                # (B, N, nb)

        wbn_p = jnp.zeros((R, Dp, nb_p), jnp.float32).at[:, :d_in, :nb_l].set(
            wbn.astype(jnp.float32))
        ww_p = jnp.zeros((nb_p, Dp), jnp.float32).at[:nb_l, :out_dim].set(
            jnp.transpose(ww).astype(jnp.float32))
        binit_p = jnp.zeros((B, Np, nb_p), jnp.float32).at[:, :N, :nb_l].set(binit)

        wbn_list.append(wbn_p)
        ww_list.append(ww_p)
        bias_list.append(jnp.reshape(bias, ()).astype(jnp.float32))
        binit_list.append(binit_p)

    wbn_stack = jnp.stack(wbn_list)                   # (L, R, Dp, nb_p)
    ww_stack = jnp.stack(ww_list)                     # (L, nb_p, Dp)
    bias_stack = jnp.stack(bias_list)                 # (L,)
    binit_stack = jnp.stack(binit_list, axis=1)       # (B, L, Np, nb_p)

    # Padded node features.
    x_p = jnp.zeros((B, Np, Dp), jnp.float32).at[:, :N, :d0].set(
        node_features.astype(jnp.float32))

    # Adjacency: relation-major along lanes, flattened, bf16 (exact for {0,1}).
    adj_perm = jnp.transpose(adj_f32, (0, 2, 1, 3))                     # (B, N, R, N)
    adj_perm = jnp.zeros((B, Np, R, Np), jnp.float32).at[:, :N, :, :N].set(adj_perm)
    adj_flat = adj_perm.reshape(B, Np, R * Np).astype(jnp.bfloat16)     # (B, Np, R*Np)

    # VMEM budget: double-buffered per-step streams + invariant weights + scratch
    # + in-kernel temporaries, capped generation-aware.
    bytes_adj = Np * R * Np * 2
    bytes_x = Np * Dp * 4
    bytes_binit = L * Np * nb_p * 4
    bytes_out = Np * Dp * 4
    bytes_weights = (L * R * Dp * nb_p + L * nb_p * Dp) * 4
    bytes_y = R * Np * nb_p * 4
    bytes_tmp = Np * R * Np * 4 + Np * nb_p * 4 + Np * Dp * 4   # adj upcast, bases, pre
    needed = 2 * (bytes_adj + bytes_x + bytes_binit + bytes_out) \
        + bytes_weights + bytes_y + bytes_tmp + (1 << 20)
    try:
        vmem_cap = int(pltpu.get_tpu_info().vmem_capacity_bytes)
    except Exception:
        vmem_cap = 64 * 1024 * 1024
    vmem_limit = min(vmem_cap * 3 // 4, max(32 * 1024 * 1024, needed))

    grid_spec = pltpu.PrefetchScalarGridSpec(
        num_scalar_prefetch=0,
        grid=(B,),
        in_specs=[
            pl.BlockSpec((1, Np, Dp), lambda b: (b, 0, 0)),             # x
            pl.BlockSpec((1, Np, R * Np), lambda b: (b, 0, 0)),         # adjacency
            pl.BlockSpec((1, L, Np, nb_p), lambda b: (b, 0, 0, 0)),     # bases init
            pl.BlockSpec((L, R, Dp, nb_p), lambda b: (0, 0, 0, 0)),     # bottleneck W
            pl.BlockSpec((L, nb_p, Dp), lambda b: (0, 0, 0)),           # output W
            pl.BlockSpec(memory_space=pltpu.MemorySpace.SMEM),          # biases
        ],
        out_specs=pl.BlockSpec((1, Np, Dp), lambda b: (b, 0, 0)),
        scratch_shapes=[pltpu.VMEM((R, Np, nb_p), jnp.float32)],
    )

    out = pl.pallas_call(
        fused_rgcn_kernel,
        out_shape=jax.ShapeDtypeStruct((B, Np, Dp), jnp.float32),
        grid_spec=grid_spec,
        compiler_params=pltpu.CompilerParams(
            dimension_semantics=("parallel",),
            vmem_limit_bytes=vmem_limit,
        ),
    )(x_p, adj_flat, binit_stack, wbn_stack, ww_stack, bias_stack)

    return out[:, :N, :out_dims[-1]]


# ----------------------------- pure-JAX reference -----------------------------

def reference_rgcn(x, rel, adj, wb, ww, bias):
    """Mirrors RelationalGraphConvolution.forward (optimized_get_supports path)."""
    B, N, d_in = x.shape
    R, Dr = rel.shape[1], rel.shape[2]
    exp_r = jnp.broadcast_to(rel[:, :, None, :], (B, R, N, Dr))
    exp_n = jnp.broadcast_to(x[:, None, :, :], (B, R, N, d_in))
    combined = jnp.concatenate([exp_n, exp_r], axis=-1)          # (B, R, N, d_in+Dr)
    supports = jnp.matmul(adj, combined)                         # (B, R, N, d_in+Dr)
    supports = jnp.transpose(supports, (0, 2, 1, 3)).reshape(B, N, -1)
    h = supports @ wb.T                                          # (B, N, nb)
    out = h @ ww.T                                               # (B, N, out_dim)
    return jax.nn.sigmoid(out + bias)


if __name__ == "__main__":
    # Small shapes consistent with the module.
    B, N = 2, 16
    node_input_dim = 32
    relation_input_dim = 16
    num_relations = 4
    hidden_dims = [32, 32]
    num_bases = 16

    key = jax.random.PRNGKey(0)
    k_x, k_rel, k_adj, k_w = jax.random.split(key, 4)

    node_features = jax.random.normal(k_x, (B, N, node_input_dim), dtype=jnp.float32)
    relation_features = jax.random.normal(
        k_rel, (B, num_relations, relation_input_dim), dtype=jnp.float32)
    adj = (jax.random.uniform(k_adj, (B, num_relations, N, N)) < 0.3).astype(jnp.float32)

    # Per-layer parameters (bottleneck Linear, output Linear, scalar bias=0),
    # matching the module's constructor wiring.
    dims = list(zip([node_input_dim] + hidden_dims, hidden_dims))
    wkeys = jax.random.split(k_w, 2 * len(dims))
    layer_params = []
    for i, (d_in, d_out) in enumerate(dims):
        fan_in = (d_in + relation_input_dim) * num_relations
        b_bound = 1.0 / math.sqrt(fan_in)
        wb = jax.random.uniform(wkeys[2 * i], (num_bases, fan_in),
                                minval=-b_bound, maxval=b_bound, dtype=jnp.float32)
        x_bound = math.sqrt(6.0 / (num_bases + d_out))   # xavier_uniform
        ww = jax.random.uniform(wkeys[2 * i + 1], (d_out, num_bases),
                                minval=-x_bound, maxval=x_bound, dtype=jnp.float32)
        bias = jnp.zeros((), dtype=jnp.float32)          # bias.data.fill_(0)
        layer_params.append((wb, ww, bias))

    out = graph_encoder(node_features, relation_features, adj, layer_params)
    out = jax.block_until_ready(out)

    ref = node_features
    for wb, ww, bias in layer_params:
        ref = reference_rgcn(ref, relation_features, adj, wb, ww, bias)

    assert out.shape == (B, N, hidden_dims[-1]), out.shape
    max_err = float(jnp.max(jnp.abs(out - ref)))
    assert jnp.allclose(out, ref, atol=1e-4, rtol=1e-4), max_err

    print("KERNEL_OK")
</pallas_src>

<mosaic_0001>
module attributes {stable_mosaic.version = 11 : i64} {
  func.func @fused_rgcn_kernel(%arg0: i32, %arg1: memref<1x16x128xf32, #tpu.memory_space<vmem>>, %arg2: memref<1x16x64xbf16, #tpu.memory_space<vmem>>, %arg3: memref<1x2x16x128xf32, #tpu.memory_space<vmem>>, %arg4: memref<2x4x128x128xf32, #tpu.memory_space<vmem>>, %arg5: memref<2x128x128xf32, #tpu.memory_space<vmem>>, %arg6: memref<2xf32, #tpu.memory_space<smem>>, %arg7: memref<1x16x128xf32, #tpu.memory_space<vmem>>, %arg8: memref<4x16x128xf32, #tpu.memory_space<vmem>>) attributes {dimension_semantics = [#tpu.dimension_semantics<parallel>], iteration_bounds = array<i64: 2>, scalar_prefetch = 0 : i64, scratch_operands = 1 : i64, tpu.core_type = #tpu.core_type<tc>, window_params = [{transform_indices = @transform_0, window_bounds = array<i64: 1, 16, 128>}, {transform_indices = @transform_1, window_bounds = array<i64: 1, 16, 64>}, {transform_indices = @transform_2, window_bounds = array<i64: 1, 2, 16, 128>}, {pipeline_mode = #tpu.pipeline_mode<synchronous>, transform_indices = @transform_3, window_bounds = array<i64: 2, 4, 128, 128>}, {pipeline_mode = #tpu.pipeline_mode<synchronous>, transform_indices = @transform_4, window_bounds = array<i64: 2, 128, 128>}, {transform_indices = @transform_5, window_bounds = array<i64: 2>}, {transform_indices = @transform_6, window_bounds = array<i64: 1, 16, 128>}]} {
    %c0 = arith.constant 0 : index
    %c0_0 = arith.constant 0 : index
    %c0_1 = arith.constant 0 : index
    %0 = vector.load %arg2[%c0, %c0_0, %c0_1] : memref<1x16x64xbf16, #tpu.memory_space<vmem>>, vector<1x16x64xbf16>
    %1 = vector.shape_cast %0 : vector<1x16x64xbf16> to vector<16x64xbf16>
    %2 = arith.extf %1 : vector<16x64xbf16> to vector<16x64xf32>
    %c0_2 = arith.constant 0 : index
    %c0_3 = arith.constant 0 : index
    %c0_4 = arith.constant 0 : index
    %3 = vector.load %arg1[%c0_2, %c0_3, %c0_4] : memref<1x16x128xf32, #tpu.memory_space<vmem>>, vector<1x16x128xf32>
    %4 = vector.shape_cast %3 : vector<1x16x128xf32> to vector<16x128xf32>
    %c0_5 = arith.constant 0 : index
    %c0_6 = arith.constant 0 : index
    %c0_7 = arith.constant 0 : index
    %c0_8 = arith.constant 0 : index
    %5 = vector.load %arg4[%c0_5, %c0_6, %c0_7, %c0_8] : memref<2x4x128x128xf32, #tpu.memory_space<vmem>>, vector<1x1x128x128xf32>
    %6 = vector.shape_cast %5 : vector<1x1x128x128xf32> to vector<128x128xf32>
    %cst = arith.constant dense<0.000000e+00> : vector<16x128xf32>
    %7 = tpu.matmul %4, %6, %cst {dimension_numbers = #tpu.dot_dimension_numbers<[1], [0], [0], [1], [0, 0, 1, 1], [], []>} : vector<16x128xf32>, vector<128x128xf32>, vector<16x128xf32> -> vector<16x128xf32>
    %c0_9 = arith.constant 0 : index
    %c0_10 = arith.constant 0 : index
    %c0_11 = arith.constant 0 : index
    %8 = vector.load %arg8[%c0_9, %c0_10, %c0_11] : memref<4x16x128xf32, #tpu.memory_space<vmem>>, vector<1x16x128xf32>
    %9 = vector.shape_cast %8 : vector<1x16x128xf32> to vector<16x128xf32>
    %10 = vector.shape_cast %7 : vector<16x128xf32> to vector<1x16x128xf32>
    tpu.vector_store %arg8[%c0_9, %c0_10, %c0_11], %10 {strides = array<i32>} : memref<4x16x128xf32, #tpu.memory_space<vmem>>, vector<1x16x128xf32>,
    %c0_12 = arith.constant 0 : index
    %c1 = arith.constant 1 : index
    %c0_13 = arith.constant 0 : index
    %c0_14 = arith.constant 0 : index
    %11 = vector.load %arg4[%c0_12, %c1, %c0_13, %c0_14] : memref<2x4x128x128xf32, #tpu.memory_space<vmem>>, vector<1x1x128x128xf32>
    %12 = vector.shape_cast %11 : vector<1x1x128x128xf32> to vector<128x128xf32>
    %cst_15 = arith.constant dense<0.000000e+00> : vector<16x128xf32>
    %13 = tpu.matmul %4, %12, %cst_15 {dimension_numbers = #tpu.dot_dimension_numbers<[1], [0], [0], [1], [0, 0, 1, 1], [], []>} : vector<16x128xf32>, vector<128x128xf32>, vector<16x128xf32> -> vector<16x128xf32>
    %c1_16 = arith.constant 1 : index
    %c0_17 = arith.constant 0 : index
    %c0_18 = arith.constant 0 : index
    %14 = vector.load %arg8[%c1_16, %c0_17, %c0_18] : memref<4x16x128xf32, #tpu.memory_space<vmem>>, vector<1x16x128xf32>
    %15 = vector.shape_cast %14 : vector<1x16x128xf32> to vector<16x128xf32>
    %16 = vector.shape_cast %13 : vector<16x128xf32> to vector<1x16x128xf32>
    tpu.vector_store %arg8[%c1_16, %c0_17, %c0_18], %16 {strides = array<i32>} : memref<4x16x128xf32, #tpu.memory_space<vmem>>, vector<1x16x128xf32>,
    %c0_19 = arith.constant 0 : index
    %c2 = arith.constant 2 : index
    %c0_20 = arith.constant 0 : index
    %c0_21 = arith.constant 0 : index
    %17 = vector.load %arg4[%c0_19, %c2, %c0_20, %c0_21] : memref<2x4x128x128xf32, #tpu.memory_space<vmem>>, vector<1x1x128x128xf32>
    %18 = vector.shape_cast %17 : vector<1x1x128x128xf32> to vector<128x128xf32>
    %cst_22 = arith.constant dense<0.000000e+00> : vector<16x128xf32>
    %19 = tpu.matmul %4, %18, %cst_22 {dimension_numbers = #tpu.dot_dimension_numbers<[1], [0], [0], [1], [0, 0, 1, 1], [], []>} : vector<16x128xf32>, vector<128x128xf32>, vector<16x128xf32> -> vector<16x128xf32>
    %c2_23 = arith.constant 2 : index
    %c0_24 = arith.constant 0 : index
    %c0_25 = arith.constant 0 : index
    %20 = vector.load %arg8[%c2_23, %c0_24, %c0_25] : memref<4x16x128xf32, #tpu.memory_space<vmem>>, vector<1x16x128xf32>
    %21 = vector.shape_cast %20 : vector<1x16x128xf32> to vector<16x128xf32>
    %22 = vector.shape_cast %19 : vector<16x128xf32> to vector<1x16x128xf32>
    tpu.vector_store %arg8[%c2_23, %c0_24, %c0_25], %22 {strides = array<i32>} : memref<4x16x128xf32, #tpu.memory_space<vmem>>, vector<1x16x128xf32>,
    %c0_26 = arith.constant 0 : index
    %c3 = arith.constant 3 : index
    %c0_27 = arith.constant 0 : index
    %c0_28 = arith.constant 0 : index
    %23 = vector.load %arg4[%c0_26, %c3, %c0_27, %c0_28] : memref<2x4x128x128xf32, #tpu.memory_space<vmem>>, vector<1x1x128x128xf32>
    %24 = vector.shape_cast %23 : vector<1x1x128x128xf32> to vector<128x128xf32>
    %cst_29 = arith.constant dense<0.000000e+00> : vector<16x128xf32>
    %25 = tpu.matmul %4, %24, %cst_29 {dimension_numbers = #tpu.dot_dimension_numbers<[1], [0], [0], [1], [0, 0, 1, 1], [], []>} : vector<16x128xf32>, vector<128x128xf32>, vector<16x128xf32> -> vector<16x128xf32>
    %c3_30 = arith.constant 3 : index
    %c0_31 = arith.constant 0 : index
    %c0_32 = arith.constant 0 : index
    %26 = vector.load %arg8[%c3_30, %c0_31, %c0_32] : memref<4x16x128xf32, #tpu.memory_space<vmem>>, vector<1x16x128xf32>
    %27 = vector.shape_cast %26 : vector<1x16x128xf32> to vector<16x128xf32>
    %28 = vector.shape_cast %25 : vector<16x128xf32> to vector<1x16x128xf32>
    tpu.vector_store %arg8[%c3_30, %c0_31, %c0_32], %28 {strides = array<i32>} : memref<4x16x128xf32, #tpu.memory_space<vmem>>, vector<1x16x128xf32>,
    %c0_33 = arith.constant 0 : index
    %c0_34 = arith.constant 0 : index
    %c0_35 = arith.constant 0 : index
    %29 = vector.load %arg8[%c0_33, %c0_34, %c0_35] : memref<4x16x128xf32, #tpu.memory_space<vmem>>, vector<4x16x128xf32>
    %30 = vector.shape_cast %29 : vector<4x16x128xf32> to vector<64x128xf32>
    %c0_36 = arith.constant 0 : index
    %c0_37 = arith.constant 0 : index
    %c0_38 = arith.constant 0 : index
    %c0_39 = arith.constant 0 : index
    %31 = vector.load %arg3[%c0_36, %c0_37, %c0_38, %c0_39] : memref<1x2x16x128xf32, #tpu.memory_space<vmem>>, vector<1x1x16x128xf32>
    %32 = vector.shape_cast %31 : vector<1x1x16x128xf32> to vector<16x128xf32>
    %cst_40 = arith.constant dense<0.000000e+00> : vector<16x128xf32>
    %33 = tpu.matmul %2, %30, %cst_40 {dimension_numbers = #tpu.dot_dimension_numbers<[1], [0], [0], [1], [0, 0, 1, 1], [], []>} : vector<16x64xf32>, vector<64x128xf32>, vector<16x128xf32> -> vector<16x128xf32>
    %34 = arith.addf %32, %33 : vector<16x128xf32>
    %c0_41 = arith.constant 0 : index
    %c0_42 = arith.constant 0 : index
    %c0_43 = arith.constant 0 : index
    %35 = vector.load %arg5[%c0_41, %c0_42, %c0_43] : memref<2x128x128xf32, #tpu.memory_space<vmem>>, vector<1x128x128xf32>
    %36 = vector.shape_cast %35 : vector<1x128x128xf32> to vector<128x128xf32>
    %cst_44 = arith.constant dense<0.000000e+00> : vector<16x128xf32>
    %37 = tpu.matmul %34, %36, %cst_44 {dimension_numbers = #tpu.dot_dimension_numbers<[1], [0], [0], [1], [0, 0, 1, 1], [], []>} : vector<16x128xf32>, vector<128x128xf32>, vector<16x128xf32> -> vector<16x128xf32>
    %c0_45 = arith.constant 0 : index
    %38 = memref.load %arg6[%c0_45] : memref<2xf32, #tpu.memory_space<smem>>
    %39 = vector.broadcast %38 : f32 to vector<16x128xf32>
    %40 = arith.addf %37, %39 : vector<16x128xf32>
    %41 = arith.negf %40 : vector<16x128xf32>
    %42 = math.exp %41 : vector<16x128xf32>
    %cst_46 = arith.constant 1.000000e+00 : f32
    %43 = vector.broadcast %cst_46 : f32 to vector<16x128xf32>
    %44 = arith.addf %43, %42 : vector<16x128xf32>
    %45 = arith.divf %43, %44 : vector<16x128xf32>
    %c1_47 = arith.constant 1 : index
    %c0_48 = arith.constant 0 : index
    %c0_49 = arith.constant 0 : index
    %c0_50 = arith.constant 0 : index
    %46 = vector.load %arg4[%c1_47, %c0_48, %c0_49, %c0_50] : memref<2x4x128x128xf32, #tpu.memory_space<vmem>>, vector<1x1x128x128xf32>
    %47 = vector.shape_cast %46 : vector<1x1x128x128xf32> to vector<128x128xf32>
    %cst_51 = arith.constant dense<0.000000e+00> : vector<16x128xf32>
    %48 = tpu.matmul %45, %47, %cst_51 {dimension_numbers = #tpu.dot_dimension_numbers<[1], [0], [0], [1], [0, 0, 1, 1], [], []>} : vector<16x128xf32>, vector<128x128xf32>, vector<16x128xf32> -> vector<16x128xf32>
    %c0_52 = arith.constant 0 : index
    %c0_53 = arith.constant 0 : index
    %c0_54 = arith.constant 0 : index
    %49 = vector.load %arg8[%c0_52, %c0_53, %c0_54] : memref<4x16x128xf32, #tpu.memory_space<vmem>>, vector<1x16x128xf32>
    %50 = vector.shape_cast %49 : vector<1x16x128xf32> to vector<16x128xf32>
    %51 = vector.shape_cast %48 : vector<16x128xf32> to vector<1x16x128xf32>
    tpu.vector_store %arg8[%c0_52, %c0_53, %c0_54], %51 {strides = array<i32>} : memref<4x16x128xf32, #tpu.memory_space<vmem>>, vector<1x16x128xf32>,
    %c1_55 = arith.constant 1 : index
    %c1_56 = arith.constant 1 : index
    %c0_57 = arith.constant 0 : index
    %c0_58 = arith.constant 0 : index
    %52 = vector.load %arg4[%c1_55, %c1_56, %c0_57, %c0_58] : memref<2x4x128x128xf32, #tpu.memory_space<vmem>>, vector<1x1x128x128xf32>
    %53 = vector.shape_cast %52 : vector<1x1x128x128xf32> to vector<128x128xf32>
    %cst_59 = arith.constant dense<0.000000e+00> : vector<16x128xf32>
    %54 = tpu.matmul %45, %53, %cst_59 {dimension_numbers = #tpu.dot_dimension_numbers<[1], [0], [0], [1], [0, 0, 1, 1], [], []>} : vector<16x128xf32>, vector<128x128xf32>, vector<16x128xf32> -> vector<16x128xf32>
    %c1_60 = arith.constant 1 : index
    %c0_61 = arith.constant 0 : index
    %c0_62 = arith.constant 0 : index
    %55 = vector.load %arg8[%c1_60, %c0_61, %c0_62] : memref<4x16x128xf32, #tpu.memory_space<vmem>>, vector<1x16x128xf32>
    %56 = vector.shape_cast %55 : vector<1x16x128xf32> to vector<16x128xf32>
    %57 = vector.shape_cast %54 : vector<16x128xf32> to vector<1x16x128xf32>
    tpu.vector_store %arg8[%c1_60, %c0_61, %c0_62], %57 {strides = array<i32>} : memref<4x16x128xf32, #tpu.memory_space<vmem>>, vector<1x16x128xf32>,
    %c1_63 = arith.constant 1 : index
    %c2_64 = arith.constant 2 : index
    %c0_65 = arith.constant 0 : index
    %c0_66 = arith.constant 0 : index
    %58 = vector.load %arg4[%c1_63, %c2_64, %c0_65, %c0_66] : memref<2x4x128x128xf32, #tpu.memory_space<vmem>>, vector<1x1x128x128xf32>
    %59 = vector.shape_cast %58 : vector<1x1x128x128xf32> to vector<128x128xf32>
    %cst_67 = arith.constant dense<0.000000e+00> : vector<16x128xf32>
    %60 = tpu.matmul %45, %59, %cst_67 {dimension_numbers = #tpu.dot_dimension_numbers<[1], [0], [0], [1], [0, 0, 1, 1], [], []>} : vector<16x128xf32>, vector<128x128xf32>, vector<16x128xf32> -> vector<16x128xf32>
    %c2_68 = arith.constant 2 : index
    %c0_69 = arith.constant 0 : index
    %c0_70 = arith.constant 0 : index
    %61 = vector.load %arg8[%c2_68, %c0_69, %c0_70] : memref<4x16x128xf32, #tpu.memory_space<vmem>>, vector<1x16x128xf32>
    %62 = vector.shape_cast %61 : vector<1x16x128xf32> to vector<16x128xf32>
    %63 = vector.shape_cast %60 : vector<16x128xf32> to vector<1x16x128xf32>
    tpu.vector_store %arg8[%c2_68, %c0_69, %c0_70], %63 {strides = array<i32>} : memref<4x16x128xf32, #tpu.memory_space<vmem>>, vector<1x16x128xf32>,
    %c1_71 = arith.constant 1 : index
    %c3_72 = arith.constant 3 : index
    %c0_73 = arith.constant 0 : index
    %c0_74 = arith.constant 0 : index
    %64 = vector.load %arg4[%c1_71, %c3_72, %c0_73, %c0_74] : memref<2x4x128x128xf32, #tpu.memory_space<vmem>>, vector<1x1x128x128xf32>
    %65 = vector.shape_cast %64 : vector<1x1x128x128xf32> to vector<128x128xf32>
    %cst_75 = arith.constant dense<0.000000e+00> : vector<16x128xf32>
    %66 = tpu.matmul %45, %65, %cst_75 {dimension_numbers = #tpu.dot_dimension_numbers<[1], [0], [0], [1], [0, 0, 1, 1], [], []>} : vector<16x128xf32>, vector<128x128xf32>, vector<16x128xf32> -> vector<16x128xf32>
    %c3_76 = arith.constant 3 : index
    %c0_77 = arith.constant 0 : index
    %c0_78 = arith.constant 0 : index
    %67 = vector.load %arg8[%c3_76, %c0_77, %c0_78] : memref<4x16x128xf32, #tpu.memory_space<vmem>>, vector<1x16x128xf32>
    %68 = vector.shape_cast %67 : vector<1x16x128xf32> to vector<16x128xf32>
    %69 = vector.shape_cast %66 : vector<16x128xf32> to vector<1x16x128xf32>
    tpu.vector_store %arg8[%c3_76, %c0_77, %c0_78], %69 {strides = array<i32>} : memref<4x16x128xf32, #tpu.memory_space<vmem>>, vector<1x16x128xf32>,
    %c0_79 = arith.constant 0 : index
    %c0_80 = arith.constant 0 : index
    %c0_81 = arith.constant 0 : index
    %70 = vector.load %arg8[%c0_79, %c0_80, %c0_81] : memref<4x16x128xf32, #tpu.memory_space<vmem>>, vector<4x16x128xf32>
    %71 = vector.shape_cast %70 : vector<4x16x128xf32> to vector<64x128xf32>
    %c0_82 = arith.constant 0 : index
    %c1_83 = arith.constant 1 : index
    %c0_84 = arith.constant 0 : index
    %c0_85 = arith.constant 0 : index
    %72 = vector.load %arg3[%c0_82, %c1_83, %c0_84, %c0_85] : memref<1x2x16x128xf32, #tpu.memory_space<vmem>>, vector<1x1x16x128xf32>
    %73 = vector.shape_cast %72 : vector<1x1x16x128xf32> to vector<16x128xf32>
    %cst_86 = arith.constant dense<0.000000e+00> : vector<16x128xf32>
    %74 = tpu.matmul %2, %71, %cst_86 {dimension_numbers = #tpu.dot_dimension_numbers<[1], [0], [0], [1], [0, 0, 1, 1], [], []>} : vector<16x64xf32>, vector<64x128xf32>, vector<16x128xf32> -> vector<16x128xf32>
    %75 = arith.addf %73, %74 : vector<16x128xf32>
    %c1_87 = arith.constant 1 : index
    %c0_88 = arith.constant 0 : index
    %c0_89 = arith.constant 0 : index
    %76 = vector.load %arg5[%c1_87, %c0_88, %c0_89] : memref<2x128x128xf32, #tpu.memory_space<vmem>>, vector<1x128x128xf32>
    %77 = vector.shape_cast %76 : vector<1x128x128xf32> to vector<128x128xf32>
    %cst_90 = arith.constant dense<0.000000e+00> : vector<16x128xf32>
    %78 = tpu.matmul %75, %77, %cst_90 {dimension_numbers = #tpu.dot_dimension_numbers<[1], [0], [0], [1], [0, 0, 1, 1], [], []>} : vector<16x128xf32>, vector<128x128xf32>, vector<16x128xf32> -> vector<16x128xf32>
    %c1_91 = arith.constant 1 : index
    %79 = memref.load %arg6[%c1_91] : memref<2xf32, #tpu.memory_space<smem>>
    %80 = vector.broadcast %79 : f32 to vector<16x128xf32>
    %81 = arith.addf %78, %80 : vector<16x128xf32>
    %82 = arith.negf %81 : vector<16x128xf32>
    %83 = math.exp %82 : vector<16x128xf32>
    %cst_92 = arith.constant 1.000000e+00 : f32
    %84 = vector.broadcast %cst_92 : f32 to vector<16x128xf32>
    %85 = arith.addf %84, %83 : vector<16x128xf32>
    %86 = arith.divf %84, %85 : vector<16x128xf32>
    %c0_93 = arith.constant 0 : index
    %c0_94 = arith.constant 0 : index
    %c0_95 = arith.constant 0 : index
    %87 = vector.load %arg7[%c0_93, %c0_94, %c0_95] : memref<1x16x128xf32, #tpu.memory_space<vmem>>, vector<1x16x128xf32>
    %88 = vector.shape_cast %87 : vector<1x16x128xf32> to vector<16x128xf32>
    %89 = vector.shape_cast %86 : vector<16x128xf32> to vector<1x16x128xf32>
    tpu.vector_store %arg7[%c0_93, %c0_94, %c0_95], %89 {strides = array<i32>} : memref<1x16x128xf32, #tpu.memory_space<vmem>>, vector<1x16x128xf32>,
    return
  }
  func.func @transform_0(%arg0: i32) -> (i32, i32, i32) {
    %c0_i32 = arith.constant 0 : i32
    %c0_i32_0 = arith.constant 0 : i32
    %c0_i32_1 = arith.constant 0 : i32
    return %arg0, %c0_i32, %c0_i32_0 : i32, i32, i32
  }
  func.func @transform_1(%arg0: i32) -> (i32, i32, i32) {
    %c0_i32 = arith.constant 0 : i32
    %c0_i32_0 = arith.constant 0 : i32
    %c0_i32_1 = arith.constant 0 : i32
    return %arg0, %c0_i32, %c0_i32_0 : i32, i32, i32
  }
  func.func @transform_2(%arg0: i32) -> (i32, i32, i32, i32) {
    %c0_i32 = arith.constant 0 : i32
    %c0_i32_0 = arith.constant 0 : i32
    %c0_i32_1 = arith.constant 0 : i32
    %c0_i32_2 = arith.constant 0 : i32
    return %arg0, %c0_i32, %c0_i32_0, %c0_i32_1 : i32, i32, i32, i32
  }
  func.func @transform_3(%arg0: i32) -> (i32, i32, i32, i32) {
    %c0_i32 = arith.constant 0 : i32
    %c0_i32_0 = arith.constant 0 : i32
    %c0_i32_1 = arith.constant 0 : i32
    %c0_i32_2 = arith.constant 0 : i32
    %c0_i32_3 = arith.constant 0 : i32
    return %c0_i32, %c0_i32_0, %c0_i32_1, %c0_i32_2 : i32, i32, i32, i32
  }
  func.func @transform_4(%arg0: i32) -> (i32, i32, i32) {
    %c0_i32 = arith.constant 0 : i32
    %c0_i32_0 = arith.constant 0 : i32
    %c0_i32_1 = arith.constant 0 : i32
    %c0_i32_2 = arith.constant 0 : i32
    return %c0_i32, %c0_i32_0, %c0_i32_1 : i32, i32, i32
  }
  func.func @transform_5(%arg0: i32) -> i32 {
    %c0_i32 = arith.constant 0 : i32
    %c0_i32_0 = arith.constant 0 : i32
    return %c0_i32 : i32
  }
  func.func @transform_6(%arg0: i32) -> (i32, i32, i32) {
    %c0_i32 = arith.constant 0 : i32
    %c0_i32_0 = arith.constant 0 : i32
    %c0_i32_1 = arith.constant 0 : i32
    return %arg0, %c0_i32, %c0_i32_0 : i32, i32, i32
  }
}

</mosaic_0001>

<llo_original>
// kernel: tpu_custom_call.1
$region0: #{tpu_custom_call.1}
  #allocation0 [shape = 'u32[]', space=smem, size = 0x4, offset = 0x4, fixed_abs, tag = 'smem constant byte address 0x4 - core index']
  #allocation1 [shape = 'u32[144,128]{1,0:T(1,128)}', space=vmem, size = 0x12000, scoped, tag = 'internal scratch']
  #allocation2 [shape = 'f32[4,16,128]{2,1,0:T(8,128)}', space=vmem, size = 0x8000, scoped, tag = 'scratch operand']
  %s0 = inlined_call_operand.hbm [shape: f32[2,16,128], index: 0, kind: input, shape index: {}]
  %s1 = inlined_call_operand.hbm [shape: bf16[2,16,64], index: 1, kind: input, shape index: {}]
  %s2 = inlined_call_operand.hbm [shape: f32[2,2,16,128], index: 2, kind: input, shape index: {}]
  %s3 = inlined_call_operand.hbm [shape: f32[2,4,128,128], index: 3, kind: input, shape index: {}]
  %s4 = inlined_call_operand.hbm [shape: f32[2,128,128], index: 4, kind: input, shape index: {}]
  %s5 = inlined_call_operand.vmem [shape: f32[2], index: 5, kind: input, shape index: {}]
  %s6 = inlined_call_operand.hbm [shape: f32[2,16,128], index: 6, kind: output, shape index: {}]
  %s7 = sld [smem:[#allocation0]]
  $region81: #{tpu_custom_call.1} parent=0
    _
  %s9 = ssub.s32 1, %s7
  %s10 = scalar_select 0, %s9, %s7
  $region1: #{tpu_custom_call.1} parent=0
    #allocation3 [shape = 'u8[16384]{0}', space=vmem, size = 0x4000, scoped, tag = 'input window, operand 0']
    #allocation4 [shape = 's32[2]{0}', space=sflag, size = 0x8, scoped, tag = 'scoped memory for tpu_custom_call.1']
    #allocation5 [shape = 's32[2]{0}', space=sflag, size = 0x8, scoped, tag = 'scoped memory for tpu_custom_call.1']
    #allocation6 [shape = 's32[2]{0}', space=sflag, size = 0x8, scoped, tag = 'scoped memory for tpu_custom_call.1']
    #allocation7 [shape = 'u8[8192]{0}', space=vmem, size = 0x2000, scoped, tag = 'input window, operand 1']
    #allocation8 [shape = 's32[2]{0}', space=sflag, size = 0x8, scoped, tag = 'scoped memory for tpu_custom_call.1']
    #allocation9 [shape = 'u8[32768]{0}', space=vmem, size = 0x8000, scoped, tag = 'input window, operand 2']
    #allocation10 [shape = 'u8[524288]{0}', space=vmem, size = 0x80000, scoped, tag = 'input window, operand 3, single buffered']
    #allocation11 [shape = 's32[1]{0}', space=sflag, size = 0x4, scoped, tag = 'scoped memory for tpu_custom_call.1']
    #allocation12 [shape = 'u8[131072]{0}', space=vmem, size = 0x20000, scoped, tag = 'input window, operand 4, single buffered']
    #allocation13 [shape = 'u8[512]{0}', space=smem, size = 0x200, scoped, tag = 'input window, operand 5, single buffered']
    #allocation14 [shape = 'u8[16384]{0}', space=vmem, size = 0x4000, scoped, tag = 'output window, operand 0']
    %11 = vsyncpa [#allocation4], 0
    %s12 = scalar_lea.sflag [#allocation4], 1
    %13 = vsyncpa %s12, 0
    %14 = vsyncpa [#allocation8], 0
    %s15 = scalar_lea.sflag [#allocation8], 1
    %16 = vsyncpa %s15, 0
    %17 = vsyncpa [#allocation11], 0
    %18 = vsyncpa [#allocation6], 0
    %19 = vsyncpa [#allocation5], 0
    %s20 = scalar_lea.sflag [#allocation5], 1
    %21 = vsyncpa %s20, 0
    loop: start=0, step=1, limit=4
    $region2: #{tpu_custom_call.1} parent=1 // loop_pre_header
      _
    $region3: #{tpu_custom_call.1} parent=1 // loop_header
      %s23 = sphi 0, %s27
      %p24 = scmp.ge.s32.totalorder %s23, 4
      %s33 = sphi 0, %s35
      %s36 = sphi 0, %s33
      %s37 = sphi 0, %s36
      %s53 = sphi 0, %s37
      %s59 = sphi 0, %s61
      %s62 = sphi 0, %s59
      %s63 = sphi 0, %s62
      %s79 = sphi 0, %s63
      %s85 = sphi 0, %s87
      %s88 = sphi 0, %s85
      %s89 = sphi 0, %s88
      %s105 = sphi 0, %s89
      %s109 = sphi 0, %s109
      %s111 = sphi 0, %s109
      %s112 = sphi 0, %s111
      %s126 = sphi 0, %s112
      %s130 = sphi 0, %s130
      %s132 = sphi 0, %s130
      %s133 = sphi 0, %s132
      %s147 = sphi 0, %s133
      %s151 = sphi 0, %s151
      %s153 = sphi 0, %s151
      %s154 = sphi 0, %s153
      %s168 = sphi 0, %s154
      %s174 = sphi 0, %s176
      %s177 = sphi 0, %s174
      %s178 = sphi 0, %s177
      %s194 = sphi 0, %s178
    $region4: #{tpu_custom_call.1} parent=1 // loop_header_branch
      %26 = sbr.rel (%p24) target = $region8
    $region5: #{tpu_custom_call.1} parent=1 // loop_body
      %s28 = ssub.s32 %s23, 1
      %s29 = ssub.s32 %s23, 2
      %s30 = sadd.s32 %s23, 1
      %s31 = ssub.s32 %s23, %s30
      %p32 = scmp.eq.s32.totalorder %s31, 0
      %s34 = sadd.s32 %s33, 1
      %s35 = scalar_select %p32, %s33, %s34
      %p38 = pneg %p32
      %p39 = scmp.eq.s32.totalorder %s23, 1
      %p40 = por %p38, %p39
      %p41 = scmp.ne.s32.totalorder %s33, %s36
      %p42 = scmp.eq.s32.totalorder %s23, 0
      %p43 = por %p41, %p42
      %p44 = scmp.ne.s32.totalorder %s33, %s36
      %p45 = scmp.eq.s32.totalorder %s28, 1
      %p46 = por %p44, %p45
      %p47 = scmp.ne.s32.totalorder %s36, %s37
      %p48 = scmp.eq.s32.totalorder %s28, 0
      %p49 = por %p47, %p48
      %p50 = scmp.ne.s32.totalorder %s36, %s37
      %p51 = scmp.eq.s32.totalorder %s29, 1
      %p52 = por %p50, %p51
      %p54 = scmp.ne.s32.totalorder %s37, %s53
      %p55 = scmp.eq.s32.totalorder %s29, 0
      %p56 = por %p54, %p55
      %s57 = ssub.s32 %s23, %s30
      %p58 = scmp.eq.s32.totalorder %s57, 0
      %s60 = sadd.s32 %s59, 1
      %s61 = scalar_select %p58, %s59, %s60
      %p64 = pneg %p58
      %p65 = scmp.eq.s32.totalorder %s23, 1
      %p66 = por %p64, %p65
      %p67 = scmp.ne.s32.totalorder %s59, %s62
      %p68 = scmp.eq.s32.totalorder %s23, 0
      %p69 = por %p67, %p68
      %p70 = scmp.ne.s32.totalorder %s59, %s62
      %p71 = scmp.eq.s32.totalorder %s28, 1
      %p72 = por %p70, %p71
      %p73 = scmp.ne.s32.totalorder %s62, %s63
      %p74 = scmp.eq.s32.totalorder %s28, 0
      %p75 = por %p73, %p74
      %p76 = scmp.ne.s32.totalorder %s62, %s63
      %p77 = scmp.eq.s32.totalorder %s29, 1
      %p78 = por %p76, %p77
      %p80 = scmp.ne.s32.totalorder %s63, %s79
      %p81 = scmp.eq.s32.totalorder %s29, 0
      %p82 = por %p80, %p81
      %s83 = ssub.s32 %s23, %s30
      %p84 = scmp.eq.s32.totalorder %s83, 0
      %s86 = sadd.s32 %s85, 1
      %s87 = scalar_select %p84, %s85, %s86
      %p90 = pneg %p84
      %p91 = scmp.eq.s32.totalorder %s23, 1
      %p92 = por %p90, %p91
      %p93 = scmp.ne.s32.totalorder %s85, %s88
      %p94 = scmp.eq.s32.totalorder %s23, 0
      %p95 = por %p93, %p94
      %p96 = scmp.ne.s32.totalorder %s85, %s88
      %p97 = scmp.eq.s32.totalorder %s28, 1
      %p98 = por %p96, %p97
      %p99 = scmp.ne.s32.totalorder %s88, %s89
      %p100 = scmp.eq.s32.totalorder %s28, 0
      %p101 = por %p99, %p100
      %p102 = scmp.ne.s32.totalorder %s88, %s89
      %p103 = scmp.eq.s32.totalorder %s29, 1
      %p104 = por %p102, %p103
      %p106 = scmp.ne.s32.totalorder %s89, %s105
      %p107 = scmp.eq.s32.totalorder %s29, 0
      %p108 = por %p106, %p107
      %s110 = sadd.s32 %s109, 1
      %p113 = scmp.eq.s32.totalorder %s23, 1
      %p114 = scmp.ne.s32.totalorder %s109, %s111
      %p115 = scmp.eq.s32.totalorder %s23, 0
      %p116 = por %p114, %p115
      %p117 = scmp.ne.s32.totalorder %s109, %s111
      %p118 = scmp.eq.s32.totalorder %s28, 1
      %p119 = por %p117, %p118
      %p120 = scmp.ne.s32.totalorder %s111, %s112
      %p121 = scmp.eq.s32.totalorder %s28, 0
      %p122 = por %p120, %p121
      %p123 = scmp.ne.s32.totalorder %s111, %s112
      %p124 = scmp.eq.s32.totalorder %s29, 1
      %p125 = por %p123, %p124
      %p127 = scmp.ne.s32.totalorder %s112, %s126
      %p128 = scmp.eq.s32.totalorder %s29, 0
      %p129 = por %p127, %p128
      %s131 = sadd.s32 %s130, 1
      %p134 = scmp.eq.s32.totalorder %s23, 1
      %p135 = scmp.ne.s32.totalorder %s130, %s132
      %p136 = scmp.eq.s32.totalorder %s23, 0
      %p137 = por %p135, %p136
      %p138 = scmp.ne.s32.totalorder %s130, %s132
      %p139 = scmp.eq.s32.totalorder %s28, 1
      %p140 = por %p138, %p139
      %p141 = scmp.ne.s32.totalorder %s132, %s133
      %p142 = scmp.eq.s32.totalorder %s28, 0
      %p143 = por %p141, %p142
      %p144 = scmp.ne.s32.totalorder %s132, %s133
      %p145 = scmp.eq.s32.totalorder %s29, 1
      %p146 = por %p144, %p145
      %p148 = scmp.ne.s32.totalorder %s133, %s147
      %p149 = scmp.eq.s32.totalorder %s29, 0
      %p150 = por %p148, %p149
      %s152 = sadd.s32 %s151, 1
      %p155 = scmp.eq.s32.totalorder %s23, 1
      %p156 = scmp.ne.s32.totalorder %s151, %s153
      %p157 = scmp.eq.s32.totalorder %s23, 0
      %p158 = por %p156, %p157
      %p159 = scmp.ne.s32.totalorder %s151, %s153
      %p160 = scmp.eq.s32.totalorder %s28, 1
      %p161 = por %p159, %p160
      %p162 = scmp.ne.s32.totalorder %s153, %s154
      %p163 = scmp.eq.s32.totalorder %s28, 0
      %p164 = por %p162, %p163
      %p165 = scmp.ne.s32.totalorder %s153, %s154
      %p166 = scmp.eq.s32.totalorder %s29, 1
      %p167 = por %p165, %p166
      %p169 = scmp.ne.s32.totalorder %s154, %s168
      %p170 = scmp.eq.s32.totalorder %s29, 0
      %p171 = por %p169, %p170
      %s172 = ssub.s32 %s23, %s30
      %p173 = scmp.eq.s32.totalorder %s172, 0
      %s175 = sadd.s32 %s174, 1
      %s176 = scalar_select %p173, %s174, %s175
      %p179 = pneg %p173
      %p180 = scmp.eq.s32.totalorder %s23, 1
      %p181 = por %p179, %p180
      %p182 = scmp.ne.s32.totalorder %s174, %s177
      %p183 = scmp.eq.s32.totalorder %s23, 0
      %p184 = por %p182, %p183
      %p185 = scmp.ne.s32.totalorder %s174, %s177
      %p186 = scmp.eq.s32.totalorder %s28, 1
      %p187 = por %p185, %p186
      %p188 = scmp.ne.s32.totalorder %s177, %s178
      %p189 = scmp.eq.s32.totalorder %s28, 0
      %p190 = por %p188, %p189
      %p191 = scmp.ne.s32.totalorder %s177, %s178
      %p192 = scmp.eq.s32.totalorder %s29, 1
      %p193 = por %p191, %p192
      %p195 = scmp.ne.s32.totalorder %s178, %s194
      %p196 = scmp.eq.s32.totalorder %s29, 0
      %p197 = por %p195, %p196
      %p198 = scmp.le.s32.totalorder 1, %s23
      %p199 = scmp.lt.s32.totalorder %s23, 3
      %p200 = pnand %p198, %p199
      %p201 = pneg %p200
      // Predicated region
      $region9: #{tpu_custom_call.1} parent=5 // pred_check
        _
      $region10: #{tpu_custom_call.1} parent=5 // pred_check_branch
        %203 = sbr.rel (%p200) target = $region12
      $region11: #{tpu_custom_call.1} parent=5 // pred_region
        %s204 = ssub.s32 %s23, 1
        // Predicated region
        $region13: #{tpu_custom_call.1} parent=11 // pred_check
          %p205 = pneg %p122
        $region14: #{tpu_custom_call.1} parent=11 // pred_check_branch
          %207 = sbr.rel (%p205) target = $region16
        $region15: #{tpu_custom_call.1} parent=11 // pred_region
          %s209 = ssub.s32 16384, 16384
          %210 = vsyncadd [#allocation11], %s209
          %s211 = sshll.u32 [#allocation10], 4
          %s212 = int_to_ptr.vmem [resolvable:$true] %s211
          %217 = dma.hbm_to_vmem [thread:$0]  %s3, 16384, %s212, [#allocation11], 128, 128, 8
        $region16: #{tpu_custom_call.1} parent=11 // pred_fallthru
          _
        // Predicated region
        $region17: #{tpu_custom_call.1} parent=11 // pred_check
          %p218 = pneg %p143
        $region18: #{tpu_custom_call.1} parent=11 // pred_check_branch
          %220 = sbr.rel (%p218) target = $region20
        $region19: #{tpu_custom_call.1} parent=11 // pred_region
          %s222 = ssub.s32 4096, 4096
          %223 = vsyncadd [#allocation11], %s222
          %s224 = sshll.u32 [#allocation12], 4
          %s225 = int_to_ptr.vmem [resolvable:$true] %s224
          %230 = dma.hbm_to_vmem [thread:$0]  %s4, 4096, %s225, [#allocation11], 128, 128, 8
        $region20: #{tpu_custom_call.1} parent=11 // pred_fallthru
          _
        // Predicated region
        $region21: #{tpu_custom_call.1} parent=11 // pred_check
          %p231 = pneg %p164
        $region22: #{tpu_custom_call.1} parent=11 // pred_check_branch
          %233 = sbr.rel (%p231) target = $region24
        $region23: #{tpu_custom_call.1} parent=11 // pred_region
          %s235 = ssub.s32 16, 16
          %236 = vsyncadd [#allocation6], %s235
          %s238 = sshll.u32 %s5, 4
          %s239 = int_to_ptr.vmem [resolvable:$true] %s238
          %241 = dma.vmem_to_smem %s239, 16, [#allocation13], [#allocation6]
        $region24: #{tpu_custom_call.1} parent=11 // pred_fallthru
          _
      $region12: #{tpu_custom_call.1} parent=5 // pred_fallthru
        _
      %p242 = scmp.lt.s32.totalorder %s23, 2
      // Predicated region
      $region25: #{tpu_custom_call.1} parent=5 // pred_check
        %p243 = pneg %p242
      $region26: #{tpu_custom_call.1} parent=5 // pred_check_branch
        %245 = sbr.rel (%p243) target = $region28
      $region27: #{tpu_custom_call.1} parent=5 // pred_region
        // Predicated region
        $region29: #{tpu_custom_call.1} parent=27 // pred_check
          %p246 = pneg %p43
        $region30: #{tpu_custom_call.1} parent=27 // pred_check_branch
          %248 = sbr.rel (%p246) target = $region32
        $region31: #{tpu_custom_call.1} parent=27 // pred_region
          %s249 = sand.u32 %s33, 1
          %s250 = scalar_lea.sflag [#allocation4], %s249
          %s251 = sand.u32 %s33, 1
          %s252 = smul.addr %s251, 16
          %s253 = scalar_lea.vmem [#allocation3], %s252
          %s255 = ssub.s32 256, 256
          %256 = vsyncadd %s250, %s255
          %s257 = smul.addr %s23, 2
          %s258 = smul.addr %s257, 128
          %s259 = scalar_lea.hbm %s0, %s258
          %s260 = sshll.u32 %s253, 4
          %s261 = int_to_ptr.vmem [resolvable:$true] %s260
          %266 = dma.hbm_to_vmem [thread:$0]  %s259, 256, %s261, %s250, 128, 128, 8
        $region32: #{tpu_custom_call.1} parent=27 // pred_fallthru
          _
        // Predicated region
        $region33: #{tpu_custom_call.1} parent=27 // pred_check
          %p267 = pneg %p69
        $region34: #{tpu_custom_call.1} parent=27 // pred_check_branch
          %269 = sbr.rel (%p267) target = $region36
        $region35: #{tpu_custom_call.1} parent=27 // pred_region
          %s270 = sand.u32 %s23, 1
          %s271 = scalar_lea.sflag [#allocation8], %s270
          %s272 = sand.u32 %s59, 1
          %s273 = smul.addr %s272, 8
          %s274 = scalar_lea.vmem [#allocation7], %s273
          %s276 = ssub.s32 128, 128
          %277 = vsyncadd %s271, %s276
          %s278 = smul.addr %s23, 2
          %s279 = smul.addr %s278, 64
          %s280 = scalar_lea.hbm %s1, %s279
          %s281 = sshll.u32 %s274, 4
          %s282 = int_to_ptr.vmem [resolvable:$true] %s281
          %287 = dma.hbm_to_vmem [thread:$0]  %s280, 128, %s282, %s271, 64, 64, 4
        $region36: #{tpu_custom_call.1} parent=27 // pred_fallthru
          _
        // Predicated region
        $region37: #{tpu_custom_call.1} parent=27 // pred_check
          %p288 = pneg %p95
        $region38: #{tpu_custom_call.1} parent=27 // pred_check_branch
          %290 = sbr.rel (%p288) target = $region40
        $region39: #{tpu_custom_call.1} parent=27 // pred_region
          %s291 = sand.u32 %s23, 1
          %s292 = scalar_lea.sflag [#allocation8], %s291
          %s293 = sand.u32 %s85, 1
          %s294 = smul.addr %s293, 32
          %s295 = scalar_lea.vmem [#allocation9], %s294
          %s297 = ssub.s32 512, 512
          %298 = vsyncadd %s292, %s297
          %s299 = smul.addr %s23, 4
          %s300 = smul.addr %s299, 128
          %s301 = scalar_lea.hbm %s2, %s300
          %s302 = sshll.u32 %s295, 4
          %s303 = int_to_ptr.vmem [resolvable:$true] %s302
          %308 = dma.hbm_to_vmem [thread:$0]  %s301, 512, %s303, %s292, 128, 128, 8
        $region40: #{tpu_custom_call.1} parent=27 // pred_fallthru
          _
      $region28: #{tpu_custom_call.1} parent=5 // pred_fallthru
        _
      %p309 = scmp.le.s32.totalorder 1, %s23
      %p310 = scmp.lt.s32.totalorder %s23, 3
      %p311 = pnand %p309, %p310
      %p312 = pneg %p311
      // Predicated region
      $region41: #{tpu_custom_call.1} parent=5 // pred_check
        _
      $region42: #{tpu_custom_call.1} parent=5 // pred_check_branch
        %314 = sbr.rel (%p311) target = $region44
      $region43: #{tpu_custom_call.1} parent=5 // pred_region
        %s315 = ssub.s32 %s23, 1
        %s316 = sand.u32 %s36, 1
        %s317 = scalar_lea.sflag [#allocation4], %s316
        %s318 = sand.u32 %s36, 1
        %s319 = smul.addr %s318, 16
        %s320 = scalar_lea.vmem [#allocation3], %s319
        // Predicated region
        $region45: #{tpu_custom_call.1} parent=43 // pred_check
          %p321 = pneg %p49
        $region46: #{tpu_custom_call.1} parent=43 // pred_check_branch
          %323 = sbr.rel (%p321) target = $region48
        $region47: #{tpu_custom_call.1} parent=43 // pred_region
          %324 = dma.done %s317, 256
        $region48: #{tpu_custom_call.1} parent=43 // pred_fallthru
          _
        %s325 = sand.u32 %s28, 1
        %s326 = scalar_lea.sflag [#allocation8], %s325
        %s327 = sand.u32 %s62, 1
        %s328 = smul.addr %s327, 8
        %s329 = scalar_lea.vmem [#allocation7], %s328
        // Predicated region
        $region49: #{tpu_custom_call.1} parent=43 // pred_check
          %p330 = pneg %p75
        $region50: #{tpu_custom_call.1} parent=43 // pred_check_branch
          %332 = sbr.rel (%p330) target = $region52
        $region51: #{tpu_custom_call.1} parent=43 // pred_region
          %333 = dma.done %s326, 128
        $region52: #{tpu_custom_call.1} parent=43 // pred_fallthru
          _
        %s334 = sand.u32 %s28, 1
        %s335 = scalar_lea.sflag [#allocation8], %s334
        %s336 = sand.u32 %s88, 1
        %s337 = smul.addr %s336, 32
        %s338 = scalar_lea.vmem [#allocation9], %s337
        // Predicated region
        $region53: #{tpu_custom_call.1} parent=43 // pred_check
          %p339 = pneg %p101
        $region54: #{tpu_custom_call.1} parent=43 // pred_check_branch
          %341 = sbr.rel (%p339) target = $region56
        $region55: #{tpu_custom_call.1} parent=43 // pred_region
          %342 = dma.done %s335, 512
        $region56: #{tpu_custom_call.1} parent=43 // pred_fallthru
          _
        // Predicated region
        $region57: #{tpu_custom_call.1} parent=43 // pred_check
          %p343 = pneg %p122
        $region58: #{tpu_custom_call.1} parent=43 // pred_check_branch
          %345 = sbr.rel (%p343) target = $region60
        $region59: #{tpu_custom_call.1} parent=43 // pred_region
          %346 = dma.done [#allocation11], 16384
        $region60: #{tpu_custom_call.1} parent=43 // pred_fallthru
          _
        // Predicated region
        $region61: #{tpu_custom_call.1} parent=43 // pred_check
          %p347 = pneg %p143
        $region62: #{tpu_custom_call.1} parent=43 // pred_check_branch
          %349 = sbr.rel (%p347) target = $region64
        $region63: #{tpu_custom_call.1} parent=43 // pred_region
          %350 = dma.done [#allocation11], 4096
        $region64: #{tpu_custom_call.1} parent=43 // pred_fallthru
          _
        // Predicated region
        $region65: #{tpu_custom_call.1} parent=43 // pred_check
          %p351 = pneg %p164
        $region66: #{tpu_custom_call.1} parent=43 // pred_check_branch
          %353 = sbr.rel (%p351) target = $region68
        $region67: #{tpu_custom_call.1} parent=43 // pred_region
          %354 = dma.done [#allocation6], 16
        $region68: #{tpu_custom_call.1} parent=43 // pred_fallthru
          _
        %355 = sfence
        %s356 = sand.u32 %s36, 1
        %s357 = scalar_lea.sflag [#allocation4], %s356
        %s358 = sand.u32 %s36, 1
        %s359 = smul.addr %s358, 16
        %s360 = scalar_lea.vmem [#allocation3], %s359
        %p361 = pneg %p49
        %p362 = pneg %p46
        %s363 = sand.u32 %s28, 1
        %s364 = scalar_lea.sflag [#allocation8], %s363
        %s365 = sand.u32 %s62, 1
        %s366 = smul.addr %s365, 8
        %s367 = scalar_lea.vmem [#allocation7], %s366
        %p368 = pneg %p75
        %p369 = pneg %p72
        %s370 = sand.u32 %s28, 1
        %s371 = scalar_lea.sflag [#allocation8], %s370
        %s372 = sand.u32 %s88, 1
        %s373 = smul.addr %s372, 32
        %s374 = scalar_lea.vmem [#allocation9], %s373
        %p375 = pneg %p101
        %p376 = pneg %p98
        %p377 = pneg %p122
        %p378 = pneg %p119
        %p379 = pneg %p143
        %p380 = pneg %p140
        %p381 = pneg %p164
        %p382 = pneg %p161
        %p383 = pneg %p190
        %p384 = pneg %p187
        %s385 = sand.u32 %s177, 1
        %s386 = scalar_lea.sflag [#allocation5], %s385
        %s387 = sand.u32 %s177, 1
        %s388 = smul.addr %s387, 16
        %s389 = scalar_lea.vmem [#allocation14], %s388
        %v390 = vld [vmem:[%s329] sm:$0xf]
        %v391 = vld [vmem:[%s329 + $0x4] sm:$0xf]
        %v392 = vunpack.c.l.bf16 %v390
        %v393 = vunpack.c.l.bf16 %v391
        %v394 = vld [vmem:[%s320] sm:$0xff]
        %v395 = vld [vmem:[%s320 + $0x8] sm:$0xff]
        %v396 = vld [vmem:[#allocation10] sm:$0xff]
        %v397 = vld [vmem:[#allocation10 + $0x8] sm:$0xff]
        %v398 = vld [vmem:[#allocation10 + $0x10] sm:$0xff]
        %v399 = vld [vmem:[#allocation10 + $0x18] sm:$0xff]
        %v400 = vld [vmem:[#allocation10 + $0x20] sm:$0xff]
        %v401 = vld [vmem:[#allocation10 + $0x28] sm:$0xff]
        %v402 = vld [vmem:[#allocation10 + $0x30] sm:$0xff]
        %v403 = vld [vmem:[#allocation10 + $0x38] sm:$0xff]
        %v404 = vld [vmem:[#allocation10 + $0x40] sm:$0xff]
        %v405 = vld [vmem:[#allocation10 + $0x48] sm:$0xff]
        %v406 = vld [vmem:[#allocation10 + $0x50] sm:$0xff]
        %v407 = vld [vmem:[#allocation10 + $0x58] sm:$0xff]
        %v408 = vld [vmem:[#allocation10 + $0x60] sm:$0xff]
        %v409 = vld [vmem:[#allocation10 + $0x68] sm:$0xff]
        %v410 = vld [vmem:[#allocation10 + $0x70] sm:$0xff]
        %v411 = vld [vmem:[#allocation10 + $0x78] sm:$0xff]
        %412 = vmatprep.subr.mxu0 0.0
        %413 = vmatpush1.msra.mxu0 %v396
        %414 = vmatprep.subr.mxu0 0.0
        %415 = vmatpush1.msra.mxu0 %v397
        %416 = vmatprep.subr.mxu0 0.0
        %417 = vmatpush1.msra.mxu0 %v398
        %418 = vmatprep.subr.mxu0 0.0
        %419 = vmatpush1.msra.mxu0 %v399
        %420 = vmatprep.subr.mxu0 0.0
        %421 = vmatpush1.msra.mxu0 %v400
        %422 = vmatprep.subr.mxu0 0.0
        %423 = vmatpush1.msra.mxu0 %v401
        %424 = vmatprep.subr.mxu0 0.0
        %425 = vmatpush1.msra.mxu0 %v402
        %426 = vmatprep.subr.mxu0 0.0
        %427 = vmatpush1.msra.mxu0 %v403
        %428 = vmatprep.subr.mxu0 0.0
        %429 = vmatpush1.msra.mxu0 %v404
        %430 = vmatprep.subr.mxu0 0.0
        %431 = vmatpush1.msra.mxu0 %v405
        %432 = vmatprep.subr.mxu0 0.0
        %433 = vmatpush1.msra.mxu0 %v406
        %434 = vmatprep.subr.mxu0 0.0
        %435 = vmatpush1.msra.mxu0 %v407
        %436 = vmatprep.subr.mxu0 0.0
        %437 = vmatpush1.msra.mxu0 %v408
        %438 = vmatprep.subr.mxu0 0.0
        %439 = vmatpush1.msra.mxu0 %v409
        %440 = vmatprep.subr.mxu0 0.0
        %441 = vmatpush1.msra.mxu0 %v410
        %442 = vmatprep.subr.mxu0 0.0
        %443 = vmatpush1.msra.mxu0 %v411
        %444 = vmatprep.subr.mxu0 0.0
        %445 = vmatpush1.msra.mxu0 0.0
        %446 = vmatprep.subr.mxu0 0.0
        %447 = vmatpush1.msra.mxu0 0.0
        %448 = vmatprep.subr.mxu0 0.0
        %449 = vmatpush1.msra.mxu0 0.0
        %450 = vmatprep.subr.mxu0 0.0
        %451 = vmatpush1.msra.mxu0 0.0
        %452 = vmatprep.subr.mxu0 0.0
        %453 = vmatpush1.msra.mxu0 0.0
        %454 = vmatprep.subr.mxu0 0.0
        %455 = vmatpush1.msra.mxu0 0.0
        %456 = vmatprep.subr.mxu0 0.0
        %457 = vmatpush1.msra.mxu0 0.0
        %458 = vmatprep.subr.mxu0 0.0
        %459 = vmatpush1.msra.mxu0 0.0
        %460 = vmatprep.subr.mxu0 0.0
        %461 = vmatpush1.msra.mxu0 0.0
        %462 = vmatprep.subr.mxu0 0.0
        %463 = vmatpush1.msra.mxu0 0.0
        %464 = vmatprep.subr.mxu0 0.0
        %465 = vmatpush1.msra.mxu0 0.0
        %466 = vmatprep.subr.mxu0 0.0
        %467 = vmatpush1.msra.mxu0 0.0
        %468 = vmatprep.subr.mxu0 0.0
        %469 = vmatpush1.msra.mxu0 0.0
        %470 = vmatprep.subr.mxu0 0.0
        %471 = vmatpush1.msra.mxu0 0.0
        %472 = vmatprep.subr.mxu0 0.0
        %473 = vmatpush1.msra.mxu0 0.0
        %474 = vmatprep.subr.mxu0 0.0
        %475 = vmatpush1.msra.mxu0 0.0
        %476 = vmatprep.mubr.f32.mxu0 0.0
        %477 = vmatmul.mubr.f32.gmra.mrb[0].mxu0 %v394
        %v478 = vpop.f32.mrb[0].mxu0
        %v479 = vadd.f32 0.0, %v478
        %v480 = vpop.f32.mrb[0].mxu0
        %481 = vmatprep.mubr.f32.mxu0 0.0
        %482 = vmatmul.mubr.f32.gmra.mrb[0].mxu0 %v395
        %v483 = vpop.f32.mrb[0].mxu0
        %v484 = vadd.f32 0.0, %v483
        %v485 = vpop.f32.mrb[0].mxu0
        %486 = vdwg.mxu0
        %487 = vst [vmem:[#allocation2] sm:$0xff] %v479
        %488 = vst [vmem:[#allocation2 + $0x8] sm:$0xff] %v484
        %s489 = scalar_lea.vmem [#allocation10], 128
        %v490 = vld [vmem:[%s489] sm:$0xff]
        %v491 = vld [vmem:[%s489 + $0x8] sm:$0xff]
        %v492 = vld [vmem:[%s489 + $0x10] sm:$0xff]
        %v493 = vld [vmem:[%s489 + $0x18] sm:$0xff]
        %v494 = vld [vmem:[%s489 + $0x20] sm:$0xff]
        %v495 = vld [vmem:[%s489 + $0x28] sm:$0xff]
        %v496 = vld [vmem:[%s489 + $0x30] sm:$0xff]
        %v497 = vld [vmem:[%s489 + $0x38] sm:$0xff]
        %v498 = vld [vmem:[%s489 + $0x40] sm:$0xff]
        %v499 = vld [vmem:[%s489 + $0x48] sm:$0xff]
        %v500 = vld [vmem:[%s489 + $0x50] sm:$0xff]
        %v501 = vld [vmem:[%s489 + $0x58] sm:$0xff]
        %v502 = vld [vmem:[%s489 + $0x60] sm:$0xff]
        %v503 = vld [vmem:[%s489 + $0x68] sm:$0xff]
        %v504 = vld [vmem:[%s489 + $0x70] sm:$0xff]
        %v505 = vld [vmem:[%s489 + $0x78] sm:$0xff]
        %506 = vmatprep.subr.mxu0 0.0
        %507 = vmatpush1.msra.mxu0 %v490
        %508 = vmatprep.subr.mxu0 0.0
        %509 = vmatpush1.msra.mxu0 %v491
        %510 = vmatprep.subr.mxu0 0.0
        %511 = vmatpush1.msra.mxu0 %v492
        %512 = vmatprep.subr.mxu0 0.0
        %513 = vmatpush1.msra.mxu0 %v493
        %514 = vmatprep.subr.mxu0 0.0
        %515 = vmatpush1.msra.mxu0 %v494
        %516 = vmatprep.subr.mxu0 0.0
        %517 = vmatpush1.msra.mxu0 %v495
        %518 = vmatprep.subr.mxu0 0.0
        %519 = vmatpush1.msra.mxu0 %v496
        %520 = vmatprep.subr.mxu0 0.0
        %521 = vmatpush1.msra.mxu0 %v497
        %522 = vmatprep.subr.mxu0 0.0
        %523 = vmatpush1.msra.mxu0 %v498
        %524 = vmatprep.subr.mxu0 0.0
        %525 = vmatpush1.msra.mxu0 %v499
        %526 = vmatprep.subr.mxu0 0.0
        %527 = vmatpush1.msra.mxu0 %v500
        %528 = vmatprep.subr.mxu0 0.0
        %529 = vmatpush1.msra.mxu0 %v501
        %530 = vmatprep.subr.mxu0 0.0
        %531 = vmatpush1.msra.mxu0 %v502
        %532 = vmatprep.subr.mxu0 0.0
        %533 = vmatpush1.msra.mxu0 %v503
        %534 = vmatprep.subr.mxu0 0.0
        %535 = vmatpush1.msra.mxu0 %v504
        %536 = vmatprep.subr.mxu0 0.0
        %537 = vmatpush1.msra.mxu0 %v505
        %538 = vmatprep.subr.mxu0 0.0
        %539 = vmatpush1.msra.mxu0 0.0
        %540 = vmatprep.subr.mxu0 0.0
        %541 = vmatpush1.msra.mxu0 0.0
        %542 = vmatprep.subr.mxu0 0.0
        %543 = vmatpush1.msra.mxu0 0.0
        %544 = vmatprep.subr.mxu0 0.0
        %545 = vmatpush1.msra.mxu0 0.0
        %546 = vmatprep.subr.mxu0 0.0
        %547 = vmatpush1.msra.mxu0 0.0
        %548 = vmatprep.subr.mxu0 0.0
        %549 = vmatpush1.msra.mxu0 0.0
        %550 = vmatprep.subr.mxu0 0.0
        %551 = vmatpush1.msra.mxu0 0.0
        %552 = vmatprep.subr.mxu0 0.0
        %553 = vmatpush1.msra.mxu0 0.0
        %554 = vmatprep.subr.mxu0 0.0
        %555 = vmatpush1.msra.mxu0 0.0
        %556 = vmatprep.subr.mxu0 0.0
        %557 = vmatpush1.msra.mxu0 0.0
        %558 = vmatprep.subr.mxu0 0.0
        %559 = vmatpush1.msra.mxu0 0.0
        %560 = vmatprep.subr.mxu0 0.0
        %561 = vmatpush1.msra.mxu0 0.0
        %562 = vmatprep.subr.mxu0 0.0
        %563 = vmatpush1.msra.mxu0 0.0
        %564 = vmatprep.subr.mxu0 0.0
        %565 = vmatpush1.msra.mxu0 0.0
        %566 = vmatprep.subr.mxu0 0.0
        %567 = vmatpush1.msra.mxu0 0.0
        %568 = vmatprep.subr.mxu0 0.0
        %569 = vmatpush1.msra.mxu0 0.0
        %570 = vmatprep.mubr.f32.mxu0 0.0
        %571 = vmatmul.mubr.f32.gmra.mrb[0].mxu0 %v394
        %v572 = vpop.f32.mrb[0].mxu0
        %v573 = vadd.f32 0.0, %v572
        %v574 = vpop.f32.mrb[0].mxu0
        %575 = vmatprep.mubr.f32.mxu0 0.0
        %576 = vmatmul.mubr.f32.gmra.mrb[0].mxu0 %v395
        %v577 = vpop.f32.mrb[0].mxu0
        %v578 = vadd.f32 0.0, %v577
        %v579 = vpop.f32.mrb[0].mxu0
        %580 = vdwg.mxu0
        %s581 = scalar_lea.vmem [#allocation2], 16
        %582 = vst [vmem:[%s581] sm:$0xff] %v573
        %583 = vst [vmem:[%s581 + $0x8] sm:$0xff] %v578
        %s584 = scalar_lea.vmem [#allocation10], 256
        %v585 = vld [vmem:[%s584] sm:$0xff]
        %v586 = vld [vmem:[%s584 + $0x8] sm:$0xff]
        %v587 = vld [vmem:[%s584 + $0x10] sm:$0xff]
        %v588 = vld [vmem:[%s584 + $0x18] sm:$0xff]
        %v589 = vld [vmem:[%s584 + $0x20] sm:$0xff]
        %v590 = vld [vmem:[%s584 + $0x28] sm:$0xff]
        %v591 = vld [vmem:[%s584 + $0x30] sm:$0xff]
        %v592 = vld [vmem:[%s584 + $0x38] sm:$0xff]
        %v593 = vld [vmem:[%s584 + $0x40] sm:$0xff]
        %v594 = vld [vmem:[%s584 + $0x48] sm:$0xff]
        %v595 = vld [vmem:[%s584 + $0x50] sm:$0xff]
        %v596 = vld [vmem:[%s584 + $0x58] sm:$0xff]
        %v597 = vld [vmem:[%s584 + $0x60] sm:$0xff]
        %v598 = vld [vmem:[%s584 + $0x68] sm:$0xff]
        %v599 = vld [vmem:[%s584 + $0x70] sm:$0xff]
        %v600 = vld [vmem:[%s584 + $0x78] sm:$0xff]
        %601 = vmatprep.subr.mxu0 0.0
        %602 = vmatpush1.msra.mxu0 %v585
        %603 = vmatprep.subr.mxu0 0.0
        %604 = vmatpush1.msra.mxu0 %v586
        %605 = vmatprep.subr.mxu0 0.0
        %606 = vmatpush1.msra.mxu0 %v587
        %607 = vmatprep.subr.mxu0 0.0
        %608 = vmatpush1.msra.mxu0 %v588
        %609 = vmatprep.subr.mxu0 0.0
        %610 = vmatpush1.msra.mxu0 %v589
        %611 = vmatprep.subr.mxu0 0.0
        %612 = vmatpush1.msra.mxu0 %v590
        %613 = vmatprep.subr.mxu0 0.0
        %614 = vmatpush1.msra.mxu0 %v591
        %615 = vmatprep.subr.mxu0 0.0
        %616 = vmatpush1.msra.mxu0 %v592
        %617 = vmatprep.subr.mxu0 0.0
        %618 = vmatpush1.msra.mxu0 %v593
        %619 = vmatprep.subr.mxu0 0.0
        %620 = vmatpush1.msra.mxu0 %v594
        %621 = vmatprep.subr.mxu0 0.0
        %622 = vmatpush1.msra.mxu0 %v595
        %623 = vmatprep.subr.mxu0 0.0
        %624 = vmatpush1.msra.mxu0 %v596
        %625 = vmatprep.subr.mxu0 0.0
        %626 = vmatpush1.msra.mxu0 %v597
        %627 = vmatprep.subr.mxu0 0.0
        %628 = vmatpush1.msra.mxu0 %v598
        %629 = vmatprep.subr.mxu0 0.0
        %630 = vmatpush1.msra.mxu0 %v599
        %631 = vmatprep.subr.mxu0 0.0
        %632 = vmatpush1.msra.mxu0 %v600
        %633 = vmatprep.subr.mxu0 0.0
        %634 = vmatpush1.msra.mxu0 0.0
        %635 = vmatprep.subr.mxu0 0.0
        %636 = vmatpush1.msra.mxu0 0.0
        %637 = vmatprep.subr.mxu0 0.0
        %638 = vmatpush1.msra.mxu0 0.0
        %639 = vmatprep.subr.mxu0 0.0
        %640 = vmatpush1.msra.mxu0 0.0
        %641 = vmatprep.subr.mxu0 0.0
        %642 = vmatpush1.msra.mxu0 0.0
        %643 = vmatprep.subr.mxu0 0.0
        %644 = vmatpush1.msra.mxu0 0.0
        %645 = vmatprep.subr.mxu0 0.0
        %646 = vmatpush1.msra.mxu0 0.0
        %647 = vmatprep.subr.mxu0 0.0
        %648 = vmatpush1.msra.mxu0 0.0
        %649 = vmatprep.subr.mxu0 0.0
        %650 = vmatpush1.msra.mxu0 0.0
        %651 = vmatprep.subr.mxu0 0.0
        %652 = vmatpush1.msra.mxu0 0.0
        %653 = vmatprep.subr.mxu0 0.0
        %654 = vmatpush1.msra.mxu0 0.0
        %655 = vmatprep.subr.mxu0 0.0
        %656 = vmatpush1.msra.mxu0 0.0
        %657 = vmatprep.subr.mxu0 0.0
        %658 = vmatpush1.msra.mxu0 0.0
        %659 = vmatprep.subr.mxu0 0.0
        %660 = vmatpush1.msra.mxu0 0.0
        %661 = vmatprep.subr.mxu0 0.0
        %662 = vmatpush1.msra.mxu0 0.0
        %663 = vmatprep.subr.mxu0 0.0
        %664 = vmatpush1.msra.mxu0 0.0
        %665 = vmatprep.mubr.f32.mxu0 0.0
        %666 = vmatmul.mubr.f32.gmra.mrb[0].mxu0 %v394
        %v667 = vpop.f32.mrb[0].mxu0
        %v668 = vadd.f32 0.0, %v667
        %v669 = vpop.f32.mrb[0].mxu0
        %670 = vmatprep.mubr.f32.mxu0 0.0
        %671 = vmatmul.mubr.f32.gmra.mrb[0].mxu0 %v395
        %v672 = vpop.f32.mrb[0].mxu0
        %v673 = vadd.f32 0.0, %v672
        %v674 = vpop.f32.mrb[0].mxu0
        %675 = vdwg.mxu0
        %s676 = scalar_lea.vmem [#allocation2], 32
        %677 = vst [vmem:[%s676] sm:$0xff] %v668
        %678 = vst [vmem:[%s676 + $0x8] sm:$0xff] %v673
        %s679 = scalar_lea.vmem [#allocation10], 384
        %v680 = vld [vmem:[%s679] sm:$0xff]
        %v681 = vld [vmem:[%s679 + $0x8] sm:$0xff]
        %v682 = vld [vmem:[%s679 + $0x10] sm:$0xff]
        %v683 = vld [vmem:[%s679 + $0x18] sm:$0xff]
        %v684 = vld [vmem:[%s679 + $0x20] sm:$0xff]
        %v685 = vld [vmem:[%s679 + $0x28] sm:$0xff]
        %v686 = vld [vmem:[%s679 + $0x30] sm:$0xff]
        %v687 = vld [vmem:[%s679 + $0x38] sm:$0xff]
        %v688 = vld [vmem:[%s679 + $0x40] sm:$0xff]
        %v689 = vld [vmem:[%s679 + $0x48] sm:$0xff]
        %v690 = vld [vmem:[%s679 + $0x50] sm:$0xff]
        %v691 = vld [vmem:[%s679 + $0x58] sm:$0xff]
        %v692 = vld [vmem:[%s679 + $0x60] sm:$0xff]
        %v693 = vld [vmem:[%s679 + $0x68] sm:$0xff]
        %v694 = vld [vmem:[%s679 + $0x70] sm:$0xff]
        %v695 = vld [vmem:[%s679 + $0x78] sm:$0xff]
        %696 = vmatprep.subr.mxu0 0.0
        %697 = vmatpush1.msra.mxu0 %v680
        %698 = vmatprep.subr.mxu0 0.0
        %699 = vmatpush1.msra.mxu0 %v681
        %700 = vmatprep.subr.mxu0 0.0
        %701 = vmatpush1.msra.mxu0 %v682
        %702 = vmatprep.subr.mxu0 0.0
        %703 = vmatpush1.msra.mxu0 %v683
        %704 = vmatprep.subr.mxu0 0.0
        %705 = vmatpush1.msra.mxu0 %v684
        %706 = vmatprep.subr.mxu0 0.0
        %707 = vmatpush1.msra.mxu0 %v685
        %708 = vmatprep.subr.mxu0 0.0
        %709 = vmatpush1.msra.mxu0 %v686
        %710 = vmatprep.subr.mxu0 0.0
        %711 = vmatpush1.msra.mxu0 %v687
        %712 = vmatprep.subr.mxu0 0.0
        %713 = vmatpush1.msra.mxu0 %v688
        %714 = vmatprep.subr.mxu0 0.0
        %715 = vmatpush1.msra.mxu0 %v689
        %716 = vmatprep.subr.mxu0 0.0
        %717 = vmatpush1.msra.mxu0 %v690
        %718 = vmatprep.subr.mxu0 0.0
        %719 = vmatpush1.msra.mxu0 %v691
        %720 = vmatprep.subr.mxu0 0.0
        %721 = vmatpush1.msra.mxu0 %v692
        %722 = vmatprep.subr.mxu0 0.0
        %723 = vmatpush1.msra.mxu0 %v693
        %724 = vmatprep.subr.mxu0 0.0
        %725 = vmatpush1.msra.mxu0 %v694
        %726 = vmatprep.subr.mxu0 0.0
        %727 = vmatpush1.msra.mxu0 %v695
        %728 = vmatprep.subr.mxu0 0.0
        %729 = vmatpush1.msra.mxu0 0.0
        %730 = vmatprep.subr.mxu0 0.0
        %731 = vmatpush1.msra.mxu0 0.0
        %732 = vmatprep.subr.mxu0 0.0
        %733 = vmatpush1.msra.mxu0 0.0
        %734 = vmatprep.subr.mxu0 0.0
        %735 = vmatpush1.msra.mxu0 0.0
        %736 = vmatprep.subr.mxu0 0.0
        %737 = vmatpush1.msra.mxu0 0.0
        %738 = vmatprep.subr.mxu0 0.0
        %739 = vmatpush1.msra.mxu0 0.0
        %740 = vmatprep.subr.mxu0 0.0
        %741 = vmatpush1.msra.mxu0 0.0
        %742 = vmatprep.subr.mxu0 0.0
        %743 = vmatpush1.msra.mxu0 0.0
        %744 = vmatprep.subr.mxu0 0.0
        %745 = vmatpush1.msra.mxu0 0.0
        %746 = vmatprep.subr.mxu0 0.0
        %747 = vmatpush1.msra.mxu0 0.0
        %748 = vmatprep.subr.mxu0 0.0
        %749 = vmatpush1.msra.mxu0 0.0
        %750 = vmatprep.subr.mxu0 0.0
        %751 = vmatpush1.msra.mxu0 0.0
        %752 = vmatprep.subr.mxu0 0.0
        %753 = vmatpush1.msra.mxu0 0.0
        %754 = vmatprep.subr.mxu0 0.0
        %755 = vmatpush1.msra.mxu0 0.0
        %756 = vmatprep.subr.mxu0 0.0
        %757 = vmatpush1.msra.mxu0 0.0
        %758 = vmatprep.subr.mxu0 0.0
        %759 = vmatpush1.msra.mxu0 0.0
        %760 = vmatprep.mubr.f32.mxu0 0.0
        %761 = vmatmul.mubr.f32.gmra.mrb[0].mxu0 %v394
        %v762 = vpop.f32.mrb[0].mxu0
        %v763 = vadd.f32 0.0, %v762
        %v764 = vpop.f32.mrb[0].mxu0
        %765 = vmatprep.mubr.f32.mxu0 0.0
        %766 = vmatmul.mubr.f32.gmra.mrb[0].mxu0 %v395
        %v767 = vpop.f32.mrb[0].mxu0
        %v768 = vadd.f32 0.0, %v767
        %v769 = vpop.f32.mrb[0].mxu0
        %770 = vdwg.mxu0
        %s771 = scalar_lea.vmem [#allocation2], 48
        %772 = vst [vmem:[%s771] sm:$0xff] %v763
        %773 = vst [vmem:[%s771 + $0x8] sm:$0xff] %v768
        %v774 = vld [vmem:[#allocation2] sm:$0xff]
        %v775 = vld [vmem:[#allocation2 + $0x8] sm:$0xff]
        %v776 = vld [vmem:[#allocation2 + $0x10] sm:$0xff]
        %v777 = vld [vmem:[#allocation2 + $0x18] sm:$0xff]
        %v778 = vld [vmem:[#allocation2 + $0x20] sm:$0xff]
        %v779 = vld [vmem:[#allocation2 + $0x28] sm:$0xff]
        %v780 = vld [vmem:[#allocation2 + $0x30] sm:$0xff]
        %v781 = vld [vmem:[#allocation2 + $0x38] sm:$0xff]
        %v782 = vld [vmem:[%s338] sm:$0xff]
        %v783 = vld [vmem:[%s338 + $0x8] sm:$0xff]
        %vm784 = vcmask 523264
        %v786 = vsel %vm784, %v392, 0
        %v789 = vsel %vm784, %v393, 0
        %791 = vmatprep.subr.mxu0 0.0
        %792 = vmatpush1.msra.mxu0 %v774
        %793 = vmatprep.subr.mxu0 0.0
        %794 = vmatpush1.msra.mxu0 %v775
        %795 = vmatprep.subr.mxu0 0.0
        %796 = vmatpush1.msra.mxu0 %v776
        %797 = vmatprep.subr.mxu0 0.0
        %798 = vmatpush1.msra.mxu0 %v777
        %799 = vmatprep.subr.mxu0 0.0
        %800 = vmatpush1.msra.mxu0 %v778
        %801 = vmatprep.subr.mxu0 0.0
        %802 = vmatpush1.msra.mxu0 %v779
        %803 = vmatprep.subr.mxu0 0.0
        %804 = vmatpush1.msra.mxu0 %v780
        %805 = vmatprep.subr.mxu0 0.0
        %806 = vmatpush1.msra.mxu0 %v781
        %807 = vmatprep.subr.mxu0 0.0
        %808 = vmatpush1.msra.mxu0 0.0
        %809 = vmatprep.subr.mxu0 0.0
        %810 = vmatpush1.msra.mxu0 0.0
        %811 = vmatprep.subr.mxu0 0.0
        %812 = vmatpush1.msra.mxu0 0.0
        %813 = vmatprep.subr.mxu0 0.0
        %814 = vmatpush1.msra.mxu0 0.0
        %815 = vmatprep.subr.mxu0 0.0
        %816 = vmatpush1.msra.mxu0 0.0
        %817 = vmatprep.subr.mxu0 0.0
        %818 = vmatpush1.msra.mxu0 0.0
        %819 = vmatprep.subr.mxu0 0.0
        %820 = vmatpush1.msra.mxu0 0.0
        %821 = vmatprep.subr.mxu0 0.0
        %822 = vmatpush1.msra.mxu0 0.0
        %823 = vmatprep.subr.mxu0 0.0
        %824 = vmatpush1.msra.mxu0 0.0
        %825 = vmatprep.subr.mxu0 0.0
        %826 = vmatpush1.msra.mxu0 0.0
        %827 = vmatprep.subr.mxu0 0.0
        %828 = vmatpush1.msra.mxu0 0.0
        %829 = vmatprep.subr.mxu0 0.0
        %830 = vmatpush1.msra.mxu0 0.0
        %831 = vmatprep.subr.mxu0 0.0
        %832 = vmatpush1.msra.mxu0 0.0
        %833 = vmatprep.subr.mxu0 0.0
        %834 = vmatpush1.msra.mxu0 0.0
        %835 = vmatprep.subr.mxu0 0.0
        %836 = vmatpush1.msra.mxu0 0.0
        %837 = vmatprep.subr.mxu0 0.0
        %838 = vmatpush1.msra.mxu0 0.0
        %839 = vmatprep.subr.mxu0 0.0
        %840 = vmatpush1.msra.mxu0 0.0
        %841 = vmatprep.subr.mxu0 0.0
        %842 = vmatpush1.msra.mxu0 0.0
        %843 = vmatprep.subr.mxu0 0.0
        %844 = vmatpush1.msra.mxu0 0.0
        %845 = vmatprep.subr.mxu0 0.0
        %846 = vmatpush1.msra.mxu0 0.0
        %847 = vmatprep.subr.mxu0 0.0
        %848 = vmatpush1.msra.mxu0 0.0
        %849 = vmatprep.subr.mxu0 0.0
        %850 = vmatpush1.msra.mxu0 0.0
        %851 = vmatprep.subr.mxu0 0.0
        %852 = vmatpush1.msra.mxu0 0.0
        %853 = vmatprep.subr.mxu0 0.0
        %854 = vmatpush1.msra.mxu0 0.0
        %855 = vmatprep.mubr.f32.mxu0 0.0
        %856 = vmatmul.mubr.f32.gmra.mrb[0].mxu0 %v786
        %v857 = vpop.f32.mrb[0].mxu0
        %v858 = vadd.f32 0.0, %v857
        %v859 = vpop.f32.mrb[0].mxu0
        %860 = vmatprep.mubr.f32.mxu0 0.0
        %861 = vmatmul.mubr.f32.gmra.mrb[0].mxu0 %v789
        %v862 = vpop.f32.mrb[0].mxu0
        %v863 = vadd.f32 0.0, %v862
        %v864 = vpop.f32.mrb[0].mxu0
        %865 = vdwg.mxu0
        %v866 = vadd.f32 %v782, %v858
        %v867 = vadd.f32 %v783, %v863
        %v868 = vld [vmem:[#allocation12] sm:$0xff]
        %v869 = vld [vmem:[#allocation12 + $0x8] sm:$0xff]
        %v870 = vld [vmem:[#allocation12 + $0x10] sm:$0xff]
        %v871 = vld [vmem:[#allocation12 + $0x18] sm:$0xff]
        %v872 = vld [vmem:[#allocation12 + $0x20] sm:$0xff]
        %v873 = vld [vmem:[#allocation12 + $0x28] sm:$0xff]
        %v874 = vld [vmem:[#allocation12 + $0x30] sm:$0xff]
        %v875 = vld [vmem:[#allocation12 + $0x38] sm:$0xff]
        %v876 = vld [vmem:[#allocation12 + $0x40] sm:$0xff]
        %v877 = vld [vmem:[#allocation12 + $0x48] sm:$0xff]
        %v878 = vld [vmem:[#allocation12 + $0x50] sm:$0xff]
        %v879 = vld [vmem:[#allocation12 + $0x58] sm:$0xff]
        %v880 = vld [vmem:[#allocation12 + $0x60] sm:$0xff]
        %v881 = vld [vmem:[#allocation12 + $0x68] sm:$0xff]
        %v882 = vld [vmem:[#allocation12 + $0x70] sm:$0xff]
        %v883 = vld [vmem:[#allocation12 + $0x78] sm:$0xff]
        %s884 = sld [smem:[#allocation13]]
        %v885 = vstv %s884
        %886 = vmatprep.subr.mxu0 0.0
        %887 = vmatpush1.msra.mxu0 %v868
        %888 = vmatprep.subr.mxu0 0.0
        %889 = vmatpush1.msra.mxu0 %v869
        %890 = vmatprep.subr.mxu0 0.0
        %891 = vmatpush1.msra.mxu0 %v870
        %892 = vmatprep.subr.mxu0 0.0
        %893 = vmatpush1.msra.mxu0 %v871
        %894 = vmatprep.subr.mxu0 0.0
        %895 = vmatpush1.msra.mxu0 %v872
        %896 = vmatprep.subr.mxu0 0.0
        %897 = vmatpush1.msra.mxu0 %v873
        %898 = vmatprep.subr.mxu0 0.0
        %899 = vmatpush1.msra.mxu0 %v874
        %900 = vmatprep.subr.mxu0 0.0
        %901 = vmatpush1.msra.mxu0 %v875
        %902 = vmatprep.subr.mxu0 0.0
        %903 = vmatpush1.msra.mxu0 %v876
        %904 = vmatprep.subr.mxu0 0.0
        %905 = vmatpush1.msra.mxu0 %v877
        %906 = vmatprep.subr.mxu0 0.0
        %907 = vmatpush1.msra.mxu0 %v878
        %908 = vmatprep.subr.mxu0 0.0
        %909 = vmatpush1.msra.mxu0 %v879
        %910 = vmatprep.subr.mxu0 0.0
        %911 = vmatpush1.msra.mxu0 %v880
        %912 = vmatprep.subr.mxu0 0.0
        %913 = vmatpush1.msra.mxu0 %v881
        %914 = vmatprep.subr.mxu0 0.0
        %915 = vmatpush1.msra.mxu0 %v882
        %916 = vmatprep.subr.mxu0 0.0
        %917 = vmatpush1.msra.mxu0 %v883
        %918 = vmatprep.subr.mxu0 0.0
        %919 = vmatpush1.msra.mxu0 0.0
        %920 = vmatprep.subr.mxu0 0.0
        %921 = vmatpush1.msra.mxu0 0.0
        %922 = vmatprep.subr.mxu0 0.0
        %923 = vmatpush1.msra.mxu0 0.0
        %924 = vmatprep.subr.mxu0 0.0
        %925 = vmatpush1.msra.mxu0 0.0
        %926 = vmatprep.subr.mxu0 0.0
        %927 = vmatpush1.msra.mxu0 0.0
        %928 = vmatprep.subr.mxu0 0.0
        %929 = vmatpush1.msra.mxu0 0.0
        %930 = vmatprep.subr.mxu0 0.0
        %931 = vmatpush1.msra.mxu0 0.0
        %932 = vmatprep.subr.mxu0 0.0
        %933 = vmatpush1.msra.mxu0 0.0
        %934 = vmatprep.subr.mxu0 0.0
        %935 = vmatpush1.msra.mxu0 0.0
        %936 = vmatprep.subr.mxu0 0.0
        %937 = vmatpush1.msra.mxu0 0.0
        %938 = vmatprep.subr.mxu0 0.0
        %939 = vmatpush1.msra.mxu0 0.0
        %940 = vmatprep.subr.mxu0 0.0
        %941 = vmatpush1.msra.mxu0 0.0
        %942 = vmatprep.subr.mxu0 0.0
        %943 = vmatpush1.msra.mxu0 0.0
        %944 = vmatprep.subr.mxu0 0.0
        %945 = vmatpush1.msra.mxu0 0.0
        %946 = vmatprep.subr.mxu0 0.0
        %947 = vmatpush1.msra.mxu0 0.0
        %948 = vmatprep.subr.mxu0 0.0
        %949 = vmatpush1.msra.mxu0 0.0
        %950 = vmatprep.mubr.f32.mxu0 0.0
        %951 = vmatmul.mubr.f32.gmra.mrb[0].mxu0 %v866
        %v952 = vpop.f32.mrb[0].mxu0
        %v953 = vadd.f32 %v885, %v952
        %v954 = vpop.f32.mrb[0].mxu0
        %955 = vmatprep.mubr.f32.mxu0 0.0
        %956 = vmatmul.mubr.f32.gmra.mrb[0].mxu0 %v867
        %v957 = vpop.f32.mrb[0].mxu0
        %v958 = vadd.f32 %v885, %v957
        %v959 = vpop.f32.mrb[0].mxu0
        %960 = vdwg.mxu0
        %v961 = vxor.u32 %v953, 2147483648
        %v962 = vxor.u32 %v958, 2147483648
        %v963 = vmul.f32 %v961, 1.442695
        %v964 = vpow.pop %v963
        %v965 = vmul.f32 %v962, 1.442695
        %v966 = vpow.pop %v965
        %v967 = vadd.f32 %v964, 1.0
        %v968 = vadd.f32 %v966, 1.0
        %v969 = vrcp.pop %v967
        %v970 = vmul.f32 1.0, %v969
        %v971 = vrcp.pop %v968
        %v972 = vmul.f32 1.0, %v971
        %s973 = scalar_lea.vmem [#allocation10], 512
        %v974 = vld [vmem:[%s973] sm:$0xff]
        %v975 = vld [vmem:[%s973 + $0x8] sm:$0xff]
        %v976 = vld [vmem:[%s973 + $0x10] sm:$0xff]
        %v977 = vld [vmem:[%s973 + $0x18] sm:$0xff]
        %v978 = vld [vmem:[%s973 + $0x20] sm:$0xff]
        %v979 = vld [vmem:[%s973 + $0x28] sm:$0xff]
        %v980 = vld [vmem:[%s973 + $0x30] sm:$0xff]
        %v981 = vld [vmem:[%s973 + $0x38] sm:$0xff]
        %v982 = vld [vmem:[%s973 + $0x40] sm:$0xff]
        %v983 = vld [vmem:[%s973 + $0x48] sm:$0xff]
        %v984 = vld [vmem:[%s973 + $0x50] sm:$0xff]
        %v985 = vld [vmem:[%s973 + $0x58] sm:$0xff]
        %v986 = vld [vmem:[%s973 + $0x60] sm:$0xff]
        %v987 = vld [vmem:[%s973 + $0x68] sm:$0xff]
        %v988 = vld [vmem:[%s973 + $0x70] sm:$0xff]
        %v989 = vld [vmem:[%s973 + $0x78] sm:$0xff]
        %990 = vmatprep.subr.mxu0 0.0
        %991 = vmatpush1.msra.mxu0 %v974
        %992 = vmatprep.subr.mxu0 0.0
        %993 = vmatpush1.msra.mxu0 %v975
        %994 = vmatprep.subr.mxu0 0.0
        %995 = vmatpush1.msra.mxu0 %v976
        %996 = vmatprep.subr.mxu0 0.0
        %997 = vmatpush1.msra.mxu0 %v977
        %998 = vmatprep.subr.mxu0 0.0
        %999 = vmatpush1.msra.mxu0 %v978
        %1000 = vmatprep.subr.mxu0 0.0
        %1001 = vmatpush1.msra.mxu0 %v979
        %1002 = vmatprep.subr.mxu0 0.0
        %1003 = vmatpush1.msra.mxu0 %v980
        %1004 = vmatprep.subr.mxu0 0.0
        %1005 = vmatpush1.msra.mxu0 %v981
        %1006 = vmatprep.subr.mxu0 0.0
        %1007 = vmatpush1.msra.mxu0 %v982
        %1008 = vmatprep.subr.mxu0 0.0
        %1009 = vmatpush1.msra.mxu0 %v983
        %1010 = vmatprep.subr.mxu0 0.0
        %1011 = vmatpush1.msra.mxu0 %v984
        %1012 = vmatprep.subr.mxu0 0.0
        %1013 = vmatpush1.msra.mxu0 %v985
        %1014 = vmatprep.subr.mxu0 0.0
        %1015 = vmatpush1.msra.mxu0 %v986
        %1016 = vmatprep.subr.mxu0 0.0
        %1017 = vmatpush1.msra.mxu0 %v987
        %1018 = vmatprep.subr.mxu0 0.0
        %1019 = vmatpush1.msra.mxu0 %v988
        %1020 = vmatprep.subr.mxu0 0.0
        %1021 = vmatpush1.msra.mxu0 %v989
        %1022 = vmatprep.subr.mxu0 0.0
        %1023 = vmatpush1.msra.mxu0 0.0
        %1024 = vmatprep.subr.mxu0 0.0
        %1025 = vmatpush1.msra.mxu0 0.0
        %1026 = vmatprep.subr.mxu0 0.0
        %1027 = vmatpush1.msra.mxu0 0.0
        %1028 = vmatprep.subr.mxu0 0.0
        %1029 = vmatpush1.msra.mxu0 0.0
        %1030 = vmatprep.subr.mxu0 0.0
        %1031 = vmatpush1.msra.mxu0 0.0
        %1032 = vmatprep.subr.mxu0 0.0
        %1033 = vmatpush1.msra.mxu0 0.0
        %1034 = vmatprep.subr.mxu0 0.0
        %1035 = vmatpush1.msra.mxu0 0.0
        %1036 = vmatprep.subr.mxu0 0.0
        %1037 = vmatpush1.msra.mxu0 0.0
        %1038 = vmatprep.subr.mxu0 0.0
        %1039 = vmatpush1.msra.mxu0 0.0
        %1040 = vmatprep.subr.mxu0 0.0
        %1041 = vmatpush1.msra.mxu0 0.0
        %1042 = vmatprep.subr.mxu0 0.0
        %1043 = vmatpush1.msra.mxu0 0.0
        %1044 = vmatprep.subr.mxu0 0.0
        %1045 = vmatpush1.msra.mxu0 0.0
        %1046 = vmatprep.subr.mxu0 0.0
        %1047 = vmatpush1.msra.mxu0 0.0
        %1048 = vmatprep.subr.mxu0 0.0
        %1049 = vmatpush1.msra.mxu0 0.0
        %1050 = vmatprep.subr.mxu0 0.0
        %1051 = vmatpush1.msra.mxu0 0.0
        %1052 = vmatprep.subr.mxu0 0.0
        %1053 = vmatpush1.msra.mxu0 0.0
        %1054 = vmatprep.mubr.f32.mxu0 0.0
        %1055 = vmatmul.mubr.f32.gmra.mrb[0].mxu0 %v970
        %v1056 = vpop.f32.mrb[0].mxu0
        %v1057 = vadd.f32 0.0, %v1056
        %v1058 = vpop.f32.mrb[0].mxu0
        %1059 = vmatprep.mubr.f32.mxu0 0.0
        %1060 = vmatmul.mubr.f32.gmra.mrb[0].mxu0 %v972
        %v1061 = vpop.f32.mrb[0].mxu0
        %v1062 = vadd.f32 0.0, %v1061
        %v1063 = vpop.f32.mrb[0].mxu0
        %1064 = vdwg.mxu0
        %1065 = vst [vmem:[#allocation2] sm:$0xff] %v1057
        %1066 = vst [vmem:[#allocation2 + $0x8] sm:$0xff] %v1062
        %s1067 = scalar_lea.vmem [#allocation10], 640
        %v1068 = vld [vmem:[%s1067] sm:$0xff]
        %v1069 = vld [vmem:[%s1067 + $0x8] sm:$0xff]
        %v1070 = vld [vmem:[%s1067 + $0x10] sm:$0xff]
        %v1071 = vld [vmem:[%s1067 + $0x18] sm:$0xff]
        %v1072 = vld [vmem:[%s1067 + $0x20] sm:$0xff]
        %v1073 = vld [vmem:[%s1067 + $0x28] sm:$0xff]
        %v1074 = vld [vmem:[%s1067 + $0x30] sm:$0xff]
        %v1075 = vld [vmem:[%s1067 + $0x38] sm:$0xff]
        %v1076 = vld [vmem:[%s1067 + $0x40] sm:$0xff]
        %v1077 = vld [vmem:[%s1067 + $0x48] sm:$0xff]
        %v1078 = vld [vmem:[%s1067 + $0x50] sm:$0xff]
        %v1079 = vld [vmem:[%s1067 + $0x58] sm:$0xff]
        %v1080 = vld [vmem:[%s1067 + $0x60] sm:$0xff]
        %v1081 = vld [vmem:[%s1067 + $0x68] sm:$0xff]
        %v1082 = vld [vmem:[%s1067 + $0x70] sm:$0xff]
        %v1083 = vld [vmem:[%s1067 + $0x78] sm:$0xff]
        %1084 = vmatprep.subr.mxu0 0.0
        %1085 = vmatpush1.msra.mxu0 %v1068
        %1086 = vmatprep.subr.mxu0 0.0
        %1087 = vmatpush1.msra.mxu0 %v1069
        %1088 = vmatprep.subr.mxu0 0.0
        %1089 = vmatpush1.msra.mxu0 %v1070
        %1090 = vmatprep.subr.mxu0 0.0
        %1091 = vmatpush1.msra.mxu0 %v1071
        %1092 = vmatprep.subr.mxu0 0.0
        %1093 = vmatpush1.msra.mxu0 %v1072
        %1094 = vmatprep.subr.mxu0 0.0
        %1095 = vmatpush1.msra.mxu0 %v1073
        %1096 = vmatprep.subr.mxu0 0.0
        %1097 = vmatpush1.msra.mxu0 %v1074
        %1098 = vmatprep.subr.mxu0 0.0
        %1099 = vmatpush1.msra.mxu0 %v1075
        %1100 = vmatprep.subr.mxu0 0.0
        %1101 = vmatpush1.msra.mxu0 %v1076
        %1102 = vmatprep.subr.mxu0 0.0
        %1103 = vmatpush1.msra.mxu0 %v1077
        %1104 = vmatprep.subr.mxu0 0.0
        %1105 = vmatpush1.msra.mxu0 %v1078
        %1106 = vmatprep.subr.mxu0 0.0
        %1107 = vmatpush1.msra.mxu0 %v1079
        %1108 = vmatprep.subr.mxu0 0.0
        %1109 = vmatpush1.msra.mxu0 %v1080
        %1110 = vmatprep.subr.mxu0 0.0
        %1111 = vmatpush1.msra.mxu0 %v1081
        %1112 = vmatprep.subr.mxu0 0.0
        %1113 = vmatpush1.msra.mxu0 %v1082
        %1114 = vmatprep.subr.mxu0 0.0
        %1115 = vmatpush1.msra.mxu0 %v1083
        %1116 = vmatprep.subr.mxu0 0.0
        %1117 = vmatpush1.msra.mxu0 0.0
        %1118 = vmatprep.subr.mxu0 0.0
        %1119 = vmatpush1.msra.mxu0 0.0
        %1120 = vmatprep.subr.mxu0 0.0
        %1121 = vmatpush1.msra.mxu0 0.0
        %1122 = vmatprep.subr.mxu0 0.0
        %1123 = vmatpush1.msra.mxu0 0.0
        %1124 = vmatprep.subr.mxu0 0.0
        %1125 = vmatpush1.msra.mxu0 0.0
        %1126 = vmatprep.subr.mxu0 0.0
        %1127 = vmatpush1.msra.mxu0 0.0
        %1128 = vmatprep.subr.mxu0 0.0
        %1129 = vmatpush1.msra.mxu0 0.0
        %1130 = vmatprep.subr.mxu0 0.0
        %1131 = vmatpush1.msra.mxu0 0.0
        %1132 = vmatprep.subr.mxu0 0.0
        %1133 = vmatpush1.msra.mxu0 0.0
        %1134 = vmatprep.subr.mxu0 0.0
        %1135 = vmatpush1.msra.mxu0 0.0
        %1136 = vmatprep.subr.mxu0 0.0
        %1137 = vmatpush1.msra.mxu0 0.0
        %1138 = vmatprep.subr.mxu0 0.0
        %1139 = vmatpush1.msra.mxu0 0.0
        %1140 = vmatprep.subr.mxu0 0.0
        %1141 = vmatpush1.msra.mxu0 0.0
        %1142 = vmatprep.subr.mxu0 0.0
        %1143 = vmatpush1.msra.mxu0 0.0
        %1144 = vmatprep.subr.mxu0 0.0
        %1145 = vmatpush1.msra.mxu0 0.0
        %1146 = vmatprep.subr.mxu0 0.0
        %1147 = vmatpush1.msra.mxu0 0.0
        %1148 = vmatprep.mubr.f32.mxu0 0.0
        %1149 = vmatmul.mubr.f32.gmra.mrb[0].mxu0 %v970
        %v1150 = vpop.f32.mrb[0].mxu0
        %v1151 = vadd.f32 0.0, %v1150
        %v1152 = vpop.f32.mrb[0].mxu0
        %1153 = vmatprep.mubr.f32.mxu0 0.0
        %1154 = vmatmul.mubr.f32.gmra.mrb[0].mxu0 %v972
        %v1155 = vpop.f32.mrb[0].mxu0
        %v1156 = vadd.f32 0.0, %v1155
        %v1157 = vpop.f32.mrb[0].mxu0
        %1158 = vdwg.mxu0
        %1159 = vst [vmem:[%s581] sm:$0xff] %v1151
        %1160 = vst [vmem:[%s581 + $0x8] sm:$0xff] %v1156
        %s1161 = scalar_lea.vmem [#allocation10], 768
        %v1162 = vld [vmem:[%s1161] sm:$0xff]
        %v1163 = vld [vmem:[%s1161 + $0x8] sm:$0xff]
        %v1164 = vld [vmem:[%s1161 + $0x10] sm:$0xff]
        %v1165 = vld [vmem:[%s1161 + $0x18] sm:$0xff]
        %v1166 = vld [vmem:[%s1161 + $0x20] sm:$0xff]
        %v1167 = vld [vmem:[%s1161 + $0x28] sm:$0xff]
        %v1168 = vld [vmem:[%s1161 + $0x30] sm:$0xff]
        %v1169 = vld [vmem:[%s1161 + $0x38] sm:$0xff]
        %v1170 = vld [vmem:[%s1161 + $0x40] sm:$0xff]
        %v1171 = vld [vmem:[%s1161 + $0x48] sm:$0xff]
        %v1172 = vld [vmem:[%s1161 + $0x50] sm:$0xff]
        %v1173 = vld [vmem:[%s1161 + $0x58] sm:$0xff]
        %v1174 = vld [vmem:[%s1161 + $0x60] sm:$0xff]
        %v1175 = vld [vmem:[%s1161 + $0x68] sm:$0xff]
        %v1176 = vld [vmem:[%s1161 + $0x70] sm:$0xff]
        %v1177 = vld [vmem:[%s1161 + $0x78] sm:$0xff]
        %1178 = vmatprep.subr.mxu0 0.0
        %1179 = vmatpush1.msra.mxu0 %v1162
        %1180 = vmatprep.subr.mxu0 0.0
        %1181 = vmatpush1.msra.mxu0 %v1163
        %1182 = vmatprep.subr.mxu0 0.0
        %1183 = vmatpush1.msra.mxu0 %v1164
        %1184 = vmatprep.subr.mxu0 0.0
        %1185 = vmatpush1.msra.mxu0 %v1165
        %1186 = vmatprep.subr.mxu0 0.0
        %1187 = vmatpush1.msra.mxu0 %v1166
        %1188 = vmatprep.subr.mxu0 0.0
        %1189 = vmatpush1.msra.mxu0 %v1167
        %1190 = vmatprep.subr.mxu0 0.0
        %1191 = vmatpush1.msra.mxu0 %v1168
        %1192 = vmatprep.subr.mxu0 0.0
        %1193 = vmatpush1.msra.mxu0 %v1169
        %1194 = vmatprep.subr.mxu0 0.0
        %1195 = vmatpush1.msra.mxu0 %v1170
        %1196 = vmatprep.subr.mxu0 0.0
        %1197 = vmatpush1.msra.mxu0 %v1171
        %1198 = vmatprep.subr.mxu0 0.0
        %1199 = vmatpush1.msra.mxu0 %v1172
        %1200 = vmatprep.subr.mxu0 0.0
        %1201 = vmatpush1.msra.mxu0 %v1173
        %1202 = vmatprep.subr.mxu0 0.0
        %1203 = vmatpush1.msra.mxu0 %v1174
        %1204 = vmatprep.subr.mxu0 0.0
        %1205 = vmatpush1.msra.mxu0 %v1175
        %1206 = vmatprep.subr.mxu0 0.0
        %1207 = vmatpush1.msra.mxu0 %v1176
        %1208 = vmatprep.subr.mxu0 0.0
        %1209 = vmatpush1.msra.mxu0 %v1177
        %1210 = vmatprep.subr.mxu0 0.0
        %1211 = vmatpush1.msra.mxu0 0.0
        %1212 = vmatprep.subr.mxu0 0.0
        %1213 = vmatpush1.msra.mxu0 0.0
        %1214 = vmatprep.subr.mxu0 0.0
        %1215 = vmatpush1.msra.mxu0 0.0
        %1216 = vmatprep.subr.mxu0 0.0
        %1217 = vmatpush1.msra.mxu0 0.0
        %1218 = vmatprep.subr.mxu0 0.0
        %1219 = vmatpush1.msra.mxu0 0.0
        %1220 = vmatprep.subr.mxu0 0.0
        %1221 = vmatpush1.msra.mxu0 0.0
        %1222 = vmatprep.subr.mxu0 0.0
        %1223 = vmatpush1.msra.mxu0 0.0
        %1224 = vmatprep.subr.mxu0 0.0
        %1225 = vmatpush1.msra.mxu0 0.0
        %1226 = vmatprep.subr.mxu0 0.0
        %1227 = vmatpush1.msra.mxu0 0.0
        %1228 = vmatprep.subr.mxu0 0.0
        %1229 = vmatpush1.msra.mxu0 0.0
        %1230 = vmatprep.subr.mxu0 0.0
        %1231 = vmatpush1.msra.mxu0 0.0
        %1232 = vmatprep.subr.mxu0 0.0
        %1233 = vmatpush1.msra.mxu0 0.0
        %1234 = vmatprep.subr.mxu0 0.0
        %1235 = vmatpush1.msra.mxu0 0.0
        %1236 = vmatprep.subr.mxu0 0.0
        %1237 = vmatpush1.msra.mxu0 0.0
        %1238 = vmatprep.subr.mxu0 0.0
        %1239 = vmatpush1.msra.mxu0 0.0
        %1240 = vmatprep.subr.mxu0 0.0
        %1241 = vmatpush1.msra.mxu0 0.0
        %1242 = vmatprep.mubr.f32.mxu0 0.0
        %1243 = vmatmul.mubr.f32.gmra.mrb[0].mxu0 %v970
        %v1244 = vpop.f32.mrb[0].mxu0
        %v1245 = vadd.f32 0.0, %v1244
        %v1246 = vpop.f32.mrb[0].mxu0
        %1247 = vmatprep.mubr.f32.mxu0 0.0
        %1248 = vmatmul.mubr.f32.gmra.mrb[0].mxu0 %v972
        %v1249 = vpop.f32.mrb[0].mxu0
        %v1250 = vadd.f32 0.0, %v1249
        %v1251 = vpop.f32.mrb[0].mxu0
        %1252 = vdwg.mxu0
        %1253 = vst [vmem:[%s676] sm:$0xff] %v1245
        %1254 = vst [vmem:[%s676 + $0x8] sm:$0xff] %v1250
        %s1255 = scalar_lea.vmem [#allocation10], 896
        %v1256 = vld [vmem:[%s1255] sm:$0xff]
        %v1257 = vld [vmem:[%s1255 + $0x8] sm:$0xff]
        %v1258 = vld [vmem:[%s1255 + $0x10] sm:$0xff]
        %v1259 = vld [vmem:[%s1255 + $0x18] sm:$0xff]
        %v1260 = vld [vmem:[%s1255 + $0x20] sm:$0xff]
        %v1261 = vld [vmem:[%s1255 + $0x28] sm:$0xff]
        %v1262 = vld [vmem:[%s1255 + $0x30] sm:$0xff]
        %v1263 = vld [vmem:[%s1255 + $0x38] sm:$0xff]
        %v1264 = vld [vmem:[%s1255 + $0x40] sm:$0xff]
        %v1265 = vld [vmem:[%s1255 + $0x48] sm:$0xff]
        %v1266 = vld [vmem:[%s1255 + $0x50] sm:$0xff]
        %v1267 = vld [vmem:[%s1255 + $0x58] sm:$0xff]
        %v1268 = vld [vmem:[%s1255 + $0x60] sm:$0xff]
        %v1269 = vld [vmem:[%s1255 + $0x68] sm:$0xff]
        %v1270 = vld [vmem:[%s1255 + $0x70] sm:$0xff]
        %v1271 = vld [vmem:[%s1255 + $0x78] sm:$0xff]
        %1272 = vmatprep.subr.mxu0 0.0
        %1273 = vmatpush1.msra.mxu0 %v1256
        %1274 = vmatprep.subr.mxu0 0.0
        %1275 = vmatpush1.msra.mxu0 %v1257
        %1276 = vmatprep.subr.mxu0 0.0
        %1277 = vmatpush1.msra.mxu0 %v1258
        %1278 = vmatprep.subr.mxu0 0.0
        %1279 = vmatpush1.msra.mxu0 %v1259
        %1280 = vmatprep.subr.mxu0 0.0
        %1281 = vmatpush1.msra.mxu0 %v1260
        %1282 = vmatprep.subr.mxu0 0.0
        %1283 = vmatpush1.msra.mxu0 %v1261
        %1284 = vmatprep.subr.mxu0 0.0
        %1285 = vmatpush1.msra.mxu0 %v1262
        %1286 = vmatprep.subr.mxu0 0.0
        %1287 = vmatpush1.msra.mxu0 %v1263
        %1288 = vmatprep.subr.mxu0 0.0
        %1289 = vmatpush1.msra.mxu0 %v1264
        %1290 = vmatprep.subr.mxu0 0.0
        %1291 = vmatpush1.msra.mxu0 %v1265
        %1292 = vmatprep.subr.mxu0 0.0
        %1293 = vmatpush1.msra.mxu0 %v1266
        %1294 = vmatprep.subr.mxu0 0.0
        %1295 = vmatpush1.msra.mxu0 %v1267
        %1296 = vmatprep.subr.mxu0 0.0
        %1297 = vmatpush1.msra.mxu0 %v1268
        %1298 = vmatprep.subr.mxu0 0.0
        %1299 = vmatpush1.msra.mxu0 %v1269
        %1300 = vmatprep.subr.mxu0 0.0
        %1301 = vmatpush1.msra.mxu0 %v1270
        %1302 = vmatprep.subr.mxu0 0.0
        %1303 = vmatpush1.msra.mxu0 %v1271
        %1304 = vmatprep.subr.mxu0 0.0
        %1305 = vmatpush1.msra.mxu0 0.0
        %1306 = vmatprep.subr.mxu0 0.0
        %1307 = vmatpush1.msra.mxu0 0.0
        %1308 = vmatprep.subr.mxu0 0.0
        %1309 = vmatpush1.msra.mxu0 0.0
        %1310 = vmatprep.subr.mxu0 0.0
        %1311 = vmatpush1.msra.mxu0 0.0
        %1312 = vmatprep.subr.mxu0 0.0
        %1313 = vmatpush1.msra.mxu0 0.0
        %1314 = vmatprep.subr.mxu0 0.0
        %1315 = vmatpush1.msra.mxu0 0.0
        %1316 = vmatprep.subr.mxu0 0.0
        %1317 = vmatpush1.msra.mxu0 0.0
        %1318 = vmatprep.subr.mxu0 0.0
        %1319 = vmatpush1.msra.mxu0 0.0
        %1320 = vmatprep.subr.mxu0 0.0
        %1321 = vmatpush1.msra.mxu0 0.0
        %1322 = vmatprep.subr.mxu0 0.0
        %1323 = vmatpush1.msra.mxu0 0.0
        %1324 = vmatprep.subr.mxu0 0.0
        %1325 = vmatpush1.msra.mxu0 0.0
        %1326 = vmatprep.subr.mxu0 0.0
        %1327 = vmatpush1.msra.mxu0 0.0
        %1328 = vmatprep.subr.mxu0 0.0
        %1329 = vmatpush1.msra.mxu0 0.0
        %1330 = vmatprep.subr.mxu0 0.0
        %1331 = vmatpush1.msra.mxu0 0.0
        %1332 = vmatprep.subr.mxu0 0.0
        %1333 = vmatpush1.msra.mxu0 0.0
        %1334 = vmatprep.subr.mxu0 0.0
        %1335 = vmatpush1.msra.mxu0 0.0
        %1336 = vmatprep.mubr.f32.mxu0 0.0
        %1337 = vmatmul.mubr.f32.gmra.mrb[0].mxu0 %v970
        %v1338 = vpop.f32.mrb[0].mxu0
        %v1339 = vadd.f32 0.0, %v1338
        %v1340 = vpop.f32.mrb[0].mxu0
        %1341 = vmatprep.mubr.f32.mxu0 0.0
        %1342 = vmatmul.mubr.f32.gmra.mrb[0].mxu0 %v972
        %v1343 = vpop.f32.mrb[0].mxu0
        %v1344 = vadd.f32 0.0, %v1343
        %v1345 = vpop.f32.mrb[0].mxu0
        %1346 = vdwg.mxu0
        %1347 = vst [vmem:[%s771] sm:$0xff] %v1339
        %1348 = vst [vmem:[%s771 + $0x8] sm:$0xff] %v1344
        %v1349 = vld [vmem:[#allocation2] sm:$0xff]
        %v1350 = vld [vmem:[#allocation2 + $0x8] sm:$0xff]
        %v1351 = vld [vmem:[#allocation2 + $0x10] sm:$0xff]
        %v1352 = vld [vmem:[#allocation2 + $0x18] sm:$0xff]
        %v1353 = vld [vmem:[#allocation2 + $0x20] sm:$0xff]
        %v1354 = vld [vmem:[#allocation2 + $0x28] sm:$0xff]
        %v1355 = vld [vmem:[#allocation2 + $0x30] sm:$0xff]
        %v1356 = vld [vmem:[#allocation2 + $0x38] sm:$0xff]
        %s1357 = scalar_lea.vmem %s338, 16 [#allocation9]
        %v1358 = vld [vmem:[%s1357] sm:$0xff]
        %v1359 = vld [vmem:[%s1357 + $0x8] sm:$0xff]
        %1360 = vmatprep.subr.mxu0 0.0
        %1361 = vmatpush1.msra.mxu0 %v1349
        %1362 = vmatprep.subr.mxu0 0.0
        %1363 = vmatpush1.msra.mxu0 %v1350
        %1364 = vmatprep.subr.mxu0 0.0
        %1365 = vmatpush1.msra.mxu0 %v1351
        %1366 = vmatprep.subr.mxu0 0.0
        %1367 = vmatpush1.msra.mxu0 %v1352
        %1368 = vmatprep.subr.mxu0 0.0
        %1369 = vmatpush1.msra.mxu0 %v1353
        %1370 = vmatprep.subr.mxu0 0.0
        %1371 = vmatpush1.msra.mxu0 %v1354
        %1372 = vmatprep.subr.mxu0 0.0
        %1373 = vmatpush1.msra.mxu0 %v1355
        %1374 = vmatprep.subr.mxu0 0.0
        %1375 = vmatpush1.msra.mxu0 %v1356
        %1376 = vmatprep.subr.mxu0 0.0
        %1377 = vmatpush1.msra.mxu0 0.0
        %1378 = vmatprep.subr.mxu0 0.0
        %1379 = vmatpush1.msra.mxu0 0.0
        %1380 = vmatprep.subr.mxu0 0.0
        %1381 = vmatpush1.msra.mxu0 0.0
        %1382 = vmatprep.subr.mxu0 0.0
        %1383 = vmatpush1.msra.mxu0 0.0
        %1384 = vmatprep.subr.mxu0 0.0
        %1385 = vmatpush1.msra.mxu0 0.0
        %1386 = vmatprep.subr.mxu0 0.0
        %1387 = vmatpush1.msra.mxu0 0.0
        %1388 = vmatprep.subr.mxu0 0.0
        %1389 = vmatpush1.msra.mxu0 0.0
        %1390 = vmatprep.subr.mxu0 0.0
        %1391 = vmatpush1.msra.mxu0 0.0
        %1392 = vmatprep.subr.mxu0 0.0
        %1393 = vmatpush1.msra.mxu0 0.0
        %1394 = vmatprep.subr.mxu0 0.0
        %1395 = vmatpush1.msra.mxu0 0.0
        %1396 = vmatprep.subr.mxu0 0.0
        %1397 = vmatpush1.msra.mxu0 0.0
        %1398 = vmatprep.subr.mxu0 0.0
        %1399 = vmatpush1.msra.mxu0 0.0
        %1400 = vmatprep.subr.mxu0 0.0
        %1401 = vmatpush1.msra.mxu0 0.0
        %1402 = vmatprep.subr.mxu0 0.0
        %1403 = vmatpush1.msra.mxu0 0.0
        %1404 = vmatprep.subr.mxu0 0.0
        %1405 = vmatpush1.msra.mxu0 0.0
        %1406 = vmatprep.subr.mxu0 0.0
        %1407 = vmatpush1.msra.mxu0 0.0
        %1408 = vmatprep.subr.mxu0 0.0
        %1409 = vmatpush1.msra.mxu0 0.0
        %1410 = vmatprep.subr.mxu0 0.0
        %1411 = vmatpush1.msra.mxu0 0.0
        %1412 = vmatprep.subr.mxu0 0.0
        %1413 = vmatpush1.msra.mxu0 0.0
        %1414 = vmatprep.subr.mxu0 0.0
        %1415 = vmatpush1.msra.mxu0 0.0
        %1416 = vmatprep.subr.mxu0 0.0
        %1417 = vmatpush1.msra.mxu0 0.0
        %1418 = vmatprep.subr.mxu0 0.0
        %1419 = vmatpush1.msra.mxu0 0.0
        %1420 = vmatprep.subr.mxu0 0.0
        %1421 = vmatpush1.msra.mxu0 0.0
        %1422 = vmatprep.subr.mxu0 0.0
        %1423 = vmatpush1.msra.mxu0 0.0
        %1424 = vmatprep.mubr.f32.mxu0 0.0
        %1425 = vmatmul.mubr.f32.gmra.mrb[0].mxu0 %v786
        %v1426 = vpop.f32.mrb[0].mxu0
        %v1427 = vadd.f32 0.0, %v1426
        %v1428 = vpop.f32.mrb[0].mxu0
        %1429 = vmatprep.mubr.f32.mxu0 0.0
        %1430 = vmatmul.mubr.f32.gmra.mrb[0].mxu0 %v789
        %v1431 = vpop.f32.mrb[0].mxu0
        %v1432 = vadd.f32 0.0, %v1431
        %v1433 = vpop.f32.mrb[0].mxu0
        %1434 = vdwg.mxu0
        %v1435 = vadd.f32 %v1358, %v1427
        %v1436 = vadd.f32 %v1359, %v1432
        %s1437 = scalar_lea.vmem [#allocation12], 128
        %v1438 = vld [vmem:[%s1437] sm:$0xff]
        %v1439 = vld [vmem:[%s1437 + $0x8] sm:$0xff]
        %v1440 = vld [vmem:[%s1437 + $0x10] sm:$0xff]
        %v1441 = vld [vmem:[%s1437 + $0x18] sm:$0xff]
        %v1442 = vld [vmem:[%s1437 + $0x20] sm:$0xff]
        %v1443 = vld [vmem:[%s1437 + $0x28] sm:$0xff]
        %v1444 = vld [vmem:[%s1437 + $0x30] sm:$0xff]
        %v1445 = vld [vmem:[%s1437 + $0x38] sm:$0xff]
        %v1446 = vld [vmem:[%s1437 + $0x40] sm:$0xff]
        %v1447 = vld [vmem:[%s1437 + $0x48] sm:$0xff]
        %v1448 = vld [vmem:[%s1437 + $0x50] sm:$0xff]
        %v1449 = vld [vmem:[%s1437 + $0x58] sm:$0xff]
        %v1450 = vld [vmem:[%s1437 + $0x60] sm:$0xff]
        %v1451 = vld [vmem:[%s1437 + $0x68] sm:$0xff]
        %v1452 = vld [vmem:[%s1437 + $0x70] sm:$0xff]
        %v1453 = vld [vmem:[%s1437 + $0x78] sm:$0xff]
        %s1454 = sld [smem:[#allocation13 + $0x1]]
        %v1455 = vstv %s1454
        %1456 = vmatprep.subr.mxu0 0.0
        %1457 = vmatpush1.msra.mxu0 %v1438
        %1458 = vmatprep.subr.mxu0 0.0
        %1459 = vmatpush1.msra.mxu0 %v1439
        %1460 = vmatprep.subr.mxu0 0.0
        %1461 = vmatpush1.msra.mxu0 %v1440
        %1462 = vmatprep.subr.mxu0 0.0
        %1463 = vmatpush1.msra.mxu0 %v1441
        %1464 = vmatprep.subr.mxu0 0.0
        %1465 = vmatpush1.msra.mxu0 %v1442
        %1466 = vmatprep.subr.mxu0 0.0
        %1467 = vmatpush1.msra.mxu0 %v1443
        %1468 = vmatprep.subr.mxu0 0.0
        %1469 = vmatpush1.msra.mxu0 %v1444
        %1470 = vmatprep.subr.mxu0 0.0
        %1471 = vmatpush1.msra.mxu0 %v1445
        %1472 = vmatprep.subr.mxu0 0.0
        %1473 = vmatpush1.msra.mxu0 %v1446
        %1474 = vmatprep.subr.mxu0 0.0
        %1475 = vmatpush1.msra.mxu0 %v1447
        %1476 = vmatprep.subr.mxu0 0.0
        %1477 = vmatpush1.msra.mxu0 %v1448
        %1478 = vmatprep.subr.mxu0 0.0
        %1479 = vmatpush1.msra.mxu0 %v1449
        %1480 = vmatprep.subr.mxu0 0.0
        %1481 = vmatpush1.msra.mxu0 %v1450
        %1482 = vmatprep.subr.mxu0 0.0
        %1483 = vmatpush1.msra.mxu0 %v1451
        %1484 = vmatprep.subr.mxu0 0.0
        %1485 = vmatpush1.msra.mxu0 %v1452
        %1486 = vmatprep.subr.mxu0 0.0
        %1487 = vmatpush1.msra.mxu0 %v1453
        %1488 = vmatprep.subr.mxu0 0.0
        %1489 = vmatpush1.msra.mxu0 0.0
        %1490 = vmatprep.subr.mxu0 0.0
        %1491 = vmatpush1.msra.mxu0 0.0
        %1492 = vmatprep.subr.mxu0 0.0
        %1493 = vmatpush1.msra.mxu0 0.0
        %1494 = vmatprep.subr.mxu0 0.0
        %1495 = vmatpush1.msra.mxu0 0.0
        %1496 = vmatprep.subr.mxu0 0.0
        %1497 = vmatpush1.msra.mxu0 0.0
        %1498 = vmatprep.subr.mxu0 0.0
        %1499 = vmatpush1.msra.mxu0 0.0
        %1500 = vmatprep.subr.mxu0 0.0
        %1501 = vmatpush1.msra.mxu0 0.0
        %1502 = vmatprep.subr.mxu0 0.0
        %1503 = vmatpush1.msra.mxu0 0.0
        %1504 = vmatprep.subr.mxu0 0.0
        %1505 = vmatpush1.msra.mxu0 0.0
        %1506 = vmatprep.subr.mxu0 0.0
        %1507 = vmatpush1.msra.mxu0 0.0
        %1508 = vmatprep.subr.mxu0 0.0
        %1509 = vmatpush1.msra.mxu0 0.0
        %1510 = vmatprep.subr.mxu0 0.0
        %1511 = vmatpush1.msra.mxu0 0.0
        %1512 = vmatprep.subr.mxu0 0.0
        %1513 = vmatpush1.msra.mxu0 0.0
        %1514 = vmatprep.subr.mxu0 0.0
        %1515 = vmatpush1.msra.mxu0 0.0
        %1516 = vmatprep.subr.mxu0 0.0
        %1517 = vmatpush1.msra.mxu0 0.0
        %1518 = vmatprep.subr.mxu0 0.0
        %1519 = vmatpush1.msra.mxu0 0.0
        %1520 = vmatprep.mubr.f32.mxu0 0.0
        %1521 = vmatmul.mubr.f32.gmra.mrb[0].mxu0 %v1435
        %v1522 = vpop.f32.mrb[0].mxu0
        %v1523 = vadd.f32 %v1455, %v1522
        %v1524 = vpop.f32.mrb[0].mxu0
        %1525 = vmatprep.mubr.f32.mxu0 0.0
        %1526 = vmatmul.mubr.f32.gmra.mrb[0].mxu0 %v1436
        %v1527 = vpop.f32.mrb[0].mxu0
        %v1528 = vadd.f32 %v1455, %v1527
        %v1529 = vpop.f32.mrb[0].mxu0
        %1530 = vdwg.mxu0
        %v1531 = vxor.u32 %v1523, 2147483648
        %v1532 = vxor.u32 %v1528, 2147483648
        %v1533 = vmul.f32 %v1531, 1.442695
        %v1534 = vpow.pop %v1533
        %v1535 = vmul.f32 %v1532, 1.442695
        %v1536 = vpow.pop %v1535
        %v1537 = vadd.f32 %v1534, 1.0
        %v1538 = vadd.f32 %v1536, 1.0
        %v1539 = vrcp.pop %v1537
        %v1540 = vmul.f32 1.0, %v1539
        %v1541 = vrcp.pop %v1538
        %v1542 = vmul.f32 1.0, %v1541
        %1543 = vst [vmem:[%s389] sm:$0xff] %v1540
        %1544 = vst [vmem:[%s389 + $0x8] sm:$0xff] %v1542
        %s1545 = sand.u32 %s177, 1
        %s1546 = scalar_lea.sflag [#allocation5], %s1545
        %s1547 = sand.u32 %s177, 1
        %s1548 = smul.addr %s1547, 16
        %s1549 = scalar_lea.vmem [#allocation14], %s1548
        // Predicated region
        $region69: #{tpu_custom_call.1} parent=43 // pred_check
          %p1550 = pneg %p187
        $region70: #{tpu_custom_call.1} parent=43 // pred_check_branch
          %1552 = sbr.rel (%p1550) target = $region72
        $region71: #{tpu_custom_call.1} parent=43 // pred_region
          %s1554 = ssub.s32 256, 256
          %1555 = vsyncadd %s1546, %s1554
          %s1556 = smul.addr %s28, 2
          %s1557 = smul.addr %s1556, 128
          %s1558 = scalar_lea.hbm %s6, %s1557
          %s1559 = sshll.u32 %s1549, 4
          %s1560 = int_to_ptr.vmem [resolvable:$true] %s1559
          %1565 = dma.vmem_to_hbm [thread:$0]  %s1560, 256, %s1558, %s1546, 128, 128, 8
        $region72: #{tpu_custom_call.1} parent=43 // pred_fallthru
          _
      $region44: #{tpu_custom_call.1} parent=5 // pred_fallthru
        _
      %p1566 = scmp.le.s32.totalorder 2, %s23
      // Predicated region
      $region73: #{tpu_custom_call.1} parent=5 // pred_check
        %p1567 = pneg %p1566
      $region74: #{tpu_custom_call.1} parent=5 // pred_check_branch
        %1569 = sbr.rel (%p1567) target = $region76
      $region75: #{tpu_custom_call.1} parent=5 // pred_region
        %s1570 = ssub.s32 %s23, 2
        // Predicated region
        $region77: #{tpu_custom_call.1} parent=75 // pred_check
          %p1571 = pneg %p193
        $region78: #{tpu_custom_call.1} parent=75 // pred_check_branch
          %1573 = sbr.rel (%p1571) target = $region80
        $region79: #{tpu_custom_call.1} parent=75 // pred_region
          %s1574 = sand.u32 %s178, 1
          %s1575 = scalar_lea.sflag [#allocation5], %s1574
          %s1576 = sand.u32 %s178, 1
          %s1577 = smul.addr %s1576, 16
          %s1578 = scalar_lea.vmem [#allocation14], %s1577
          %1579 = dma.done %s1575, 256
        $region80: #{tpu_custom_call.1} parent=75 // pred_fallthru
          _
      $region76: #{tpu_custom_call.1} parent=5 // pred_fallthru
        _
    $region6: #{tpu_custom_call.1} parent=1 // loop_footer
      %s27 = sadd.s32 1, %s23
    $region7: #{tpu_custom_call.1} parent=1 // loop_footer_branch
      %22 = sbr.rel target = $region3
    $region8: #{tpu_custom_call.1} parent=1 // loop_exit
      _
    %1580 = vsyncpa [#allocation4], 1
    %s1581 = scalar_lea.sflag [#allocation4], 1
    %1582 = vsyncpa %s1581, 1
    %1583 = vsyncpa [#allocation8], 1
    %s1584 = scalar_lea.sflag [#allocation8], 1
    %1585 = vsyncpa %s1584, 1
    %1586 = vsyncpa [#allocation11], 1
    %1587 = vsyncpa [#allocation5], 1
    %s1588 = scalar_lea.sflag [#allocation5], 1
    %1589 = vsyncpa %s1588, 1
    %1590 = vsyncpa [#allocation6], 1
    %s1591 = scalar_lea.sflag [#allocation6], 1
    %1592 = vsyncpa %s1591, 1

</llo_original>
